<compile_context>
chip_gen: v7x
topology: tpu7x:2x2x1
jax: 0.10.0
libtpu: 0.0.40
codegen_flags: <defaults>
</compile_context>

<pallas_src>
import functools

import jax
import jax.numpy as jnp
from jax.experimental import pallas as pl
from jax.experimental.pallas import tpu as pltpu


def _circular_pad_kernel(x_ref, o_ref, *, dims, pads):
    """Wrap-pad a (B, D, H, W) block into (B, D+pd, H+ph, W+pw).

    All writes are direct slice stores; H and D halos are sourced from the
    already-padded portion of the output block, so no concatenated
    intermediates are ever materialized.
    """
    D, H, W = dims
    (pdl, pdr), (phl, phr), (pwl, pwr) = pads

    # ---- Center + W halos (all D planes, the center H rows) ---------------
    o_ref[:, pdl:pdl + D, phl:phl + H, pwl:pwl + W] = x_ref[...]
    if pwl > 0:
        o_ref[:, pdl:pdl + D, phl:phl + H, 0:pwl] = x_ref[:, :, :, W - pwl:W]
    if pwr > 0:
        o_ref[:, pdl:pdl + D, phl:phl + H, pwl + W:pwl + W + pwr] = (
            x_ref[:, :, :, 0:pwr])

    # ---- H halos: rows inside o_ref are already W-padded -------------------
    if phl > 0:
        o_ref[:, pdl:pdl + D, 0:phl, :] = o_ref[:, pdl:pdl + D, H:H + phl, :]
    if phr > 0:
        o_ref[:, pdl:pdl + D, phl + H:phl + H + phr, :] = (
            o_ref[:, pdl:pdl + D, phl:phl + phr, :])

    # ---- D halos: planes inside o_ref are already H/W-padded ---------------
    if pdl > 0:
        o_ref[:, 0:pdl, :, :] = o_ref[:, D:D + pdl, :, :]
    if pdr > 0:
        o_ref[:, pdl + D:pdl + D + pdr, :, :] = o_ref[:, pdl:pdl + pdr, :, :]


def _pick_nc_block(nc, in_vol_bytes, out_vol_bytes,
                   target_bytes=2 << 20, min_steps=2):
    """Largest divisor of `nc` whose per-step block stays under `target_bytes`
    per array (keeps double-buffered VMEM well inside the v7x 32 MiB scoped
    default), preferring >= `min_steps` grid steps so the parallel grid axis
    can be sharded across v7x's two TensorCores."""
    per_vol = max(in_vol_bytes, out_vol_bytes)
    divisors = [d for d in range(1, nc + 1) if nc % d == 0]
    ok = [d for d in divisors if d * per_vol <= target_bytes]
    if not ok:
        return 1
    preferred = [d for d in ok if nc // d >= min_steps]
    return max(preferred) if preferred else max(ok)


def circular_pad_3d(x, padding=(1, 1, 1, 1, 1, 1)):
    """JAX/Pallas equivalent of the PyTorch circular_pad_3d module.

    Args:
      x: (N, C, D, H, W) array.
      padding: PyTorch order (W_left, W_right, H_left, H_right, D_left, D_right).
    Returns:
      (N, C, D + pdl + pdr, H + phl + phr, W + pwl + pwr) array.
    """
    pwl, pwr, phl, phr, pdl, pdr = padding
    N, C, D, H, W = x.shape

    # PyTorch circular padding requires each pad amount to be <= that dim.
    assert 0 <= pwl <= W and 0 <= pwr <= W, "W circular pad must be in [0, W]"
    assert 0 <= phl <= H and 0 <= phr <= H, "H circular pad must be in [0, H]"
    assert 0 <= pdl <= D and 0 <= pdr <= D, "D circular pad must be in [0, D]"

    Do, Ho, Wo = D + pdl + pdr, H + phl + phr, W + pwl + pwr
    NC = N * C
    x2 = x.reshape(NC, D, H, W)

    itemsize = x.dtype.itemsize
    in_vol_bytes = D * H * W * itemsize
    out_vol_bytes = Do * Ho * Wo * itemsize
    bnc = _pick_nc_block(NC, in_vol_bytes, out_vol_bytes)
    grid = (NC // bnc,)

    kernel = functools.partial(
        _circular_pad_kernel,
        dims=(D, H, W),
        pads=((pdl, pdr), (phl, phr), (pwl, pwr)),
    )

    out = pl.pallas_call(
        kernel,
        grid=grid,
        in_specs=[pl.BlockSpec((bnc, D, H, W), lambda i: (i, 0, 0, 0))],
        out_specs=pl.BlockSpec((bnc, Do, Ho, Wo), lambda i: (i, 0, 0, 0)),
        out_shape=jax.ShapeDtypeStruct((NC, Do, Ho, Wo), x.dtype),
        compiler_params=pltpu.CompilerParams(
            dimension_semantics=("parallel",)),
        cost_estimate=pl.CostEstimate(
            flops=0,
            transcendentals=0,
            bytes_accessed=NC * (in_vol_bytes + out_vol_bytes)),
    )(x2)

    return out.reshape(N, C, Do, Ho, Wo)


if __name__ == "__main__":
    key = jax.random.PRNGKey(0)
    # Small 5D input consistent with 3D circular padding: (N, C, D, H, W)
    x = jax.random.normal(key, (2, 4, 8, 16, 16), dtype=jnp.float32)

    def ref_pad(x, pad):
        # Circular padding == numpy/jnp "wrap" padding on the spatial dims.
        return jnp.pad(
            x,
            ((0, 0), (0, 0),
             (pad[4], pad[5]), (pad[2], pad[3]), (pad[0], pad[1])),
            mode="wrap",
        )

    for pad in [(1, 1, 1, 1, 1, 1), (2, 1, 0, 3, 1, 2)]:
        out = jax.block_until_ready(circular_pad_3d(x, pad))
        ref = ref_pad(x, pad)
        assert out.shape == ref.shape, (pad, out.shape, ref.shape)
        assert jnp.array_equal(out, ref), f"mismatch vs reference for pad={pad}"

    print("KERNEL_OK")
</pallas_src>

<mosaic_0001>
module attributes {stable_mosaic.version = 11 : i64} {
  func.func @_circular_pad_kernel(%arg0: i32, %arg1: memref<4x8x16x16xf32, #tpu.memory_space<vmem>>, %arg2: memref<4x10x18x18xf32, #tpu.memory_space<vmem>>) attributes {dimension_semantics = [#tpu.dimension_semantics<parallel>], iteration_bounds = array<i64: 2>, scalar_prefetch = 0 : i64, scratch_operands = 0 : i64, tpu.core_type = #tpu.core_type<tc>, window_params = [{transform_indices = @transform_0, window_bounds = array<i64: 4, 8, 16, 16>}, {transform_indices = @transform_1, window_bounds = array<i64: 4, 10, 18, 18>}]} {
    %c0 = arith.constant 0 : index
    %c0_0 = arith.constant 0 : index
    %c0_1 = arith.constant 0 : index
    %c0_2 = arith.constant 0 : index
    %0 = vector.load %arg1[%c0, %c0_0, %c0_1, %c0_2] : memref<4x8x16x16xf32, #tpu.memory_space<vmem>>, vector<4x8x16x16xf32>
    %c0_3 = arith.constant 0 : index
    %c1 = arith.constant 1 : index
    %c1_4 = arith.constant 1 : index
    %c1_5 = arith.constant 1 : index
    %1 = vector.load %arg2[%c0_3, %c1, %c1_4, %c1_5] : memref<4x10x18x18xf32, #tpu.memory_space<vmem>>, vector<4x8x16x16xf32>
    tpu.vector_store %arg2[%c0_3, %c1, %c1_4, %c1_5], %0 {strides = array<i32>} : memref<4x10x18x18xf32, #tpu.memory_space<vmem>>, vector<4x8x16x16xf32>,
    %c0_6 = arith.constant 0 : index
    %c0_7 = arith.constant 0 : index
    %c0_8 = arith.constant 0 : index
    %c15 = arith.constant 15 : index
    %2 = vector.load %arg1[%c0_6, %c0_7, %c0_8, %c15] : memref<4x8x16x16xf32, #tpu.memory_space<vmem>>, vector<4x8x16x1xf32>
    %c0_9 = arith.constant 0 : index
    %c1_10 = arith.constant 1 : index
    %c1_11 = arith.constant 1 : index
    %c0_12 = arith.constant 0 : index
    %3 = vector.load %arg2[%c0_9, %c1_10, %c1_11, %c0_12] : memref<4x10x18x18xf32, #tpu.memory_space<vmem>>, vector<4x8x16x1xf32>
    tpu.vector_store %arg2[%c0_9, %c1_10, %c1_11, %c0_12], %2 {strides = array<i32>} : memref<4x10x18x18xf32, #tpu.memory_space<vmem>>, vector<4x8x16x1xf32>,
    %c0_13 = arith.constant 0 : index
    %c0_14 = arith.constant 0 : index
    %c0_15 = arith.constant 0 : index
    %c0_16 = arith.constant 0 : index
    %4 = vector.load %arg1[%c0_13, %c0_14, %c0_15, %c0_16] : memref<4x8x16x16xf32, #tpu.memory_space<vmem>>, vector<4x8x16x1xf32>
    %c0_17 = arith.constant 0 : index
    %c1_18 = arith.constant 1 : index
    %c1_19 = arith.constant 1 : index
    %c17 = arith.constant 17 : index
    %5 = vector.load %arg2[%c0_17, %c1_18, %c1_19, %c17] : memref<4x10x18x18xf32, #tpu.memory_space<vmem>>, vector<4x8x16x1xf32>
    tpu.vector_store %arg2[%c0_17, %c1_18, %c1_19, %c17], %4 {strides = array<i32>} : memref<4x10x18x18xf32, #tpu.memory_space<vmem>>, vector<4x8x16x1xf32>,
    %c0_20 = arith.constant 0 : index
    %c1_21 = arith.constant 1 : index
    %c16 = arith.constant 16 : index
    %c0_22 = arith.constant 0 : index
    %6 = vector.load %arg2[%c0_20, %c1_21, %c16, %c0_22] : memref<4x10x18x18xf32, #tpu.memory_space<vmem>>, vector<4x8x1x18xf32>
    %c0_23 = arith.constant 0 : index
    %c1_24 = arith.constant 1 : index
    %c0_25 = arith.constant 0 : index
    %c0_26 = arith.constant 0 : index
    %7 = vector.load %arg2[%c0_23, %c1_24, %c0_25, %c0_26] : memref<4x10x18x18xf32, #tpu.memory_space<vmem>>, vector<4x8x1x18xf32>
    tpu.vector_store %arg2[%c0_23, %c1_24, %c0_25, %c0_26], %6 {strides = array<i32>} : memref<4x10x18x18xf32, #tpu.memory_space<vmem>>, vector<4x8x1x18xf32>,
    %c0_27 = arith.constant 0 : index
    %c1_28 = arith.constant 1 : index
    %c1_29 = arith.constant 1 : index
    %c0_30 = arith.constant 0 : index
    %8 = vector.load %arg2[%c0_27, %c1_28, %c1_29, %c0_30] : memref<4x10x18x18xf32, #tpu.memory_space<vmem>>, vector<4x8x1x18xf32>
    %c0_31 = arith.constant 0 : index
    %c1_32 = arith.constant 1 : index
    %c17_33 = arith.constant 17 : index
    %c0_34 = arith.constant 0 : index
    %9 = vector.load %arg2[%c0_31, %c1_32, %c17_33, %c0_34] : memref<4x10x18x18xf32, #tpu.memory_space<vmem>>, vector<4x8x1x18xf32>
    tpu.vector_store %arg2[%c0_31, %c1_32, %c17_33, %c0_34], %8 {strides = array<i32>} : memref<4x10x18x18xf32, #tpu.memory_space<vmem>>, vector<4x8x1x18xf32>,
    %c0_35 = arith.constant 0 : index
    %c8 = arith.constant 8 : index
    %c0_36 = arith.constant 0 : index
    %c0_37 = arith.constant 0 : index
    %10 = vector.load %arg2[%c0_35, %c8, %c0_36, %c0_37] : memref<4x10x18x18xf32, #tpu.memory_space<vmem>>, vector<4x1x18x18xf32>
    %c0_38 = arith.constant 0 : index
    %c0_39 = arith.constant 0 : index
    %c0_40 = arith.constant 0 : index
    %c0_41 = arith.constant 0 : index
    %11 = vector.load %arg2[%c0_38, %c0_39, %c0_40, %c0_41] : memref<4x10x18x18xf32, #tpu.memory_space<vmem>>, vector<4x1x18x18xf32>
    tpu.vector_store %arg2[%c0_38, %c0_39, %c0_40, %c0_41], %10 {strides = array<i32>} : memref<4x10x18x18xf32, #tpu.memory_space<vmem>>, vector<4x1x18x18xf32>,
    %c0_42 = arith.constant 0 : index
    %c1_43 = arith.constant 1 : index
    %c0_44 = arith.constant 0 : index
    %c0_45 = arith.constant 0 : index
    %12 = vector.load %arg2[%c0_42, %c1_43, %c0_44, %c0_45] : memref<4x10x18x18xf32, #tpu.memory_space<vmem>>, vector<4x1x18x18xf32>
    %c0_46 = arith.constant 0 : index
    %c9 = arith.constant 9 : index
    %c0_47 = arith.constant 0 : index
    %c0_48 = arith.constant 0 : index
    %13 = vector.load %arg2[%c0_46, %c9, %c0_47, %c0_48] : memref<4x10x18x18xf32, #tpu.memory_space<vmem>>, vector<4x1x18x18xf32>
    tpu.vector_store %arg2[%c0_46, %c9, %c0_47, %c0_48], %12 {strides = array<i32>} : memref<4x10x18x18xf32, #tpu.memory_space<vmem>>, vector<4x1x18x18xf32>,
    return
  }
  func.func @transform_0(%arg0: i32) -> (i32, i32, i32, i32) {
    %c0_i32 = arith.constant 0 : i32
    %c0_i32_0 = arith.constant 0 : i32
    %c0_i32_1 = arith.constant 0 : i32
    %c0_i32_2 = arith.constant 0 : i32
    return %arg0, %c0_i32, %c0_i32_0, %c0_i32_1 : i32, i32, i32, i32
  }
  func.func @transform_1(%arg0: i32) -> (i32, i32, i32, i32) {
    %c0_i32 = arith.constant 0 : i32
    %c0_i32_0 = arith.constant 0 : i32
    %c0_i32_1 = arith.constant 0 : i32
    %c0_i32_2 = arith.constant 0 : i32
    return %arg0, %c0_i32, %c0_i32_0, %c0_i32_1 : i32, i32, i32, i32
  }
}

</mosaic_0001>

<llo_original>
// kernel: tpu_custom_call.1
$region0: #{tpu_custom_call.1}
  #allocation0 [shape = 'u32[]', space=smem, size = 0x4, offset = 0x4, fixed_abs, tag = 'smem constant byte address 0x4 - core index']
  #allocation1 [shape = 'u32[144,128]{1,0:T(1,128)}', space=vmem, size = 0x12000, scoped, tag = 'internal scratch']
  %s0 = inlined_call_operand.hbm [shape: f32[8,8,16,16], index: 0, kind: input, shape index: {}]
  %s1 = inlined_call_operand.vmem [shape: f32[8,10,18,18], index: 1, kind: output, shape index: {}]
  %s2 = sld [smem:[#allocation0]]
  $region41: #{tpu_custom_call.1} parent=0
    _
  %s4 = ssub.s32 1, %s2
  %s5 = scalar_select 0, %s4, %s2
  $region1: #{tpu_custom_call.1} parent=0
    #allocation2 [shape = 'u8[524288]{0}', space=vmem, size = 0x80000, scoped, tag = 'input window, operand 0']
    #allocation3 [shape = 's32[2]{0}', space=sflag, size = 0x8, scoped, tag = 'scoped memory for tpu_custom_call.1']
    %6 = vsyncpa [#allocation3], 0
    %s7 = scalar_lea.sflag [#allocation3], 1
    %8 = vsyncpa %s7, 0
    loop: start=0, step=1, limit=4
    $region2: #{tpu_custom_call.1} parent=1 // loop_pre_header
      _
    $region3: #{tpu_custom_call.1} parent=1 // loop_header
      %s10 = sphi 0, %s14
      %p11 = scmp.ge.s32.totalorder %s10, 4
      %s20 = sphi 0, %s22
      %s23 = sphi 0, %s20
      %s24 = sphi 0, %s23
      %s40 = sphi 0, %s24
      %s46 = sphi 0, %s48
      %s49 = sphi 0, %s46
      %s50 = sphi 0, %s49
      %s66 = sphi 0, %s50
    $region4: #{tpu_custom_call.1} parent=1 // loop_header_branch
      %13 = sbr.rel (%p11) target = $region8
    $region5: #{tpu_custom_call.1} parent=1 // loop_body
      %s15 = ssub.s32 %s10, 1
      %s16 = ssub.s32 %s10, 2
      %s17 = sadd.s32 %s10, 1
      %s18 = ssub.s32 %s10, %s17
      %p19 = scmp.eq.s32.totalorder %s18, 0
      %s21 = sadd.s32 %s20, 1
      %s22 = scalar_select %p19, %s20, %s21
      %p25 = pneg %p19
      %p26 = scmp.eq.s32.totalorder %s10, 1
      %p27 = por %p25, %p26
      %p28 = scmp.ne.s32.totalorder %s20, %s23
      %p29 = scmp.eq.s32.totalorder %s10, 0
      %p30 = por %p28, %p29
      %p31 = scmp.ne.s32.totalorder %s20, %s23
      %p32 = scmp.eq.s32.totalorder %s15, 1
      %p33 = por %p31, %p32
      %p34 = scmp.ne.s32.totalorder %s23, %s24
      %p35 = scmp.eq.s32.totalorder %s15, 0
      %p36 = por %p34, %p35
      %p37 = scmp.ne.s32.totalorder %s23, %s24
      %p38 = scmp.eq.s32.totalorder %s16, 1
      %p39 = por %p37, %p38
      %p41 = scmp.ne.s32.totalorder %s24, %s40
      %p42 = scmp.eq.s32.totalorder %s16, 0
      %p43 = por %p41, %p42
      %s44 = ssub.s32 %s10, %s17
      %p45 = scmp.eq.s32.totalorder %s44, 0
      %s47 = sadd.s32 %s46, 1
      %s48 = scalar_select %p45, %s46, %s47
      %p51 = pneg %p45
      %p52 = scmp.eq.s32.totalorder %s10, 1
      %p53 = por %p51, %p52
      %p54 = scmp.ne.s32.totalorder %s46, %s49
      %p55 = scmp.eq.s32.totalorder %s10, 0
      %p56 = por %p54, %p55
      %p57 = scmp.ne.s32.totalorder %s46, %s49
      %p58 = scmp.eq.s32.totalorder %s15, 1
      %p59 = por %p57, %p58
      %p60 = scmp.ne.s32.totalorder %s49, %s50
      %p61 = scmp.eq.s32.totalorder %s15, 0
      %p62 = por %p60, %p61
      %p63 = scmp.ne.s32.totalorder %s49, %s50
      %p64 = scmp.eq.s32.totalorder %s16, 1
      %p65 = por %p63, %p64
      %p67 = scmp.ne.s32.totalorder %s50, %s66
      %p68 = scmp.eq.s32.totalorder %s16, 0
      %p69 = por %p67, %p68
      %p70 = scmp.le.s32.totalorder 1, %s10
      %p71 = scmp.lt.s32.totalorder %s10, 3
      %p72 = pnand %p70, %p71
      %p73 = pneg %p72
      // Predicated region
      $region9: #{tpu_custom_call.1} parent=5 // pred_check
        _
      $region10: #{tpu_custom_call.1} parent=5 // pred_check_branch
        %75 = sbr.rel (%p72) target = $region12
      $region11: #{tpu_custom_call.1} parent=5 // pred_region
        %s76 = ssub.s32 %s10, 1
      $region12: #{tpu_custom_call.1} parent=5 // pred_fallthru
        _
      %p77 = scmp.lt.s32.totalorder %s10, 2
      // Predicated region
      $region13: #{tpu_custom_call.1} parent=5 // pred_check
        %p78 = pneg %p77
      $region14: #{tpu_custom_call.1} parent=5 // pred_check_branch
        %80 = sbr.rel (%p78) target = $region16
      $region15: #{tpu_custom_call.1} parent=5 // pred_region
        // Predicated region
        $region17: #{tpu_custom_call.1} parent=15 // pred_check
          %p81 = pneg %p30
        $region18: #{tpu_custom_call.1} parent=15 // pred_check_branch
          %83 = sbr.rel (%p81) target = $region20
        $region19: #{tpu_custom_call.1} parent=15 // pred_region
          %s84 = sand.u32 %s20, 1
          %s85 = scalar_lea.sflag [#allocation3], %s84
          %s86 = sand.u32 %s20, 1
          %s87 = smul.addr %s86, 512
          %s88 = scalar_lea.vmem [#allocation2], %s87
          %s89 = smul.u32 4, %s10
          %s91 = ssub.s32 8192, 8192
          %92 = vsyncadd %s85, %s91
          %s93 = smul.addr %s89, 16
          %s94 = smul.addr %s93, 128
          %s95 = scalar_lea.hbm %s0, %s94
          %s96 = sshll.u32 %s88, 4
          %s97 = int_to_ptr.vmem [resolvable:$true] %s96
          %102 = dma.hbm_to_vmem [thread:$0]  %s95, 8192, %s97, %s85, 128, 128, 8
        $region20: #{tpu_custom_call.1} parent=15 // pred_fallthru
          _
      $region16: #{tpu_custom_call.1} parent=5 // pred_fallthru
        _
      %p103 = scmp.le.s32.totalorder 1, %s10
      %p104 = scmp.lt.s32.totalorder %s10, 3
      %p105 = pnand %p103, %p104
      %p106 = pneg %p105
      // Predicated region
      $region21: #{tpu_custom_call.1} parent=5 // pred_check
        _
      $region22: #{tpu_custom_call.1} parent=5 // pred_check_branch
        %108 = sbr.rel (%p105) target = $region24
      $region23: #{tpu_custom_call.1} parent=5 // pred_region
        %s109 = ssub.s32 %s10, 1
        %s110 = sand.u32 %s23, 1
        %s111 = scalar_lea.sflag [#allocation3], %s110
        %s112 = sand.u32 %s23, 1
        %s113 = smul.addr %s112, 512
        %s114 = scalar_lea.vmem [#allocation2], %s113
        // Predicated region
        $region25: #{tpu_custom_call.1} parent=23 // pred_check
          %p115 = pneg %p36
        $region26: #{tpu_custom_call.1} parent=23 // pred_check_branch
          %117 = sbr.rel (%p115) target = $region28
        $region27: #{tpu_custom_call.1} parent=23 // pred_region
          %118 = dma.done %s111, 8192
        $region28: #{tpu_custom_call.1} parent=23 // pred_fallthru
          _
        %s119 = sand.u32 %s23, 1
        %s120 = scalar_lea.sflag [#allocation3], %s119
        %s121 = sand.u32 %s23, 1
        %s122 = smul.addr %s121, 512
        %s123 = scalar_lea.vmem [#allocation2], %s122
        %p124 = pneg %p36
        %p125 = pneg %p33
        %p126 = pneg %p62
        %p127 = pneg %p59
        %s128 = smul.u32 4, %s15
        %p129 = scmp.lt.s32.totalorder %s128, 7
        %s130 = scalar_select %p129, %s128, 7
        %s131 = smul.addr %s130, 30
        %s132 = smul.addr %s131, 8
        %s133 = scalar_lea.vmem %s1, %s132
        %s134 = smul.u32 4, %s15
        %s135 = smul.u32 4, %s15
        %p136 = scmp.lt.s32.totalorder %s135, 7
        %s137 = scalar_select %p136, %s135, 7
        %s138 = smul.addr %s137, 30
        %s139 = smul.addr %s138, 8
        %s140 = scalar_lea.vmem %s1, %s139
        %s141 = smul.u32 4, %s15
        %v142 = vld [vmem:[%s114] sm:$0xff]
        %v143 = vld [vmem:[%s114 + $0x8] sm:$0xff]
        %v144 = vld [vmem:[%s114 + $0x10] sm:$0xff]
        %v145 = vld [vmem:[%s114 + $0x18] sm:$0xff]
        %v146 = vld [vmem:[%s114 + $0x20] sm:$0xff]
        %v147 = vld [vmem:[%s114 + $0x28] sm:$0xff]
        %v148 = vld [vmem:[%s114 + $0x30] sm:$0xff]
        %v149 = vld [vmem:[%s114 + $0x38] sm:$0xff]
        %v150 = vld [vmem:[%s114 + $0x40] sm:$0xff]
        %v151 = vld [vmem:[%s114 + $0x48] sm:$0xff]
        %v152 = vld [vmem:[%s114 + $0x50] sm:$0xff]
        %v153 = vld [vmem:[%s114 + $0x58] sm:$0xff]
        %v154 = vld [vmem:[%s114 + $0x60] sm:$0xff]
        %v155 = vld [vmem:[%s114 + $0x68] sm:$0xff]
        %v156 = vld [vmem:[%s114 + $0x70] sm:$0xff]
        %v157 = vld [vmem:[%s114 + $0x78] sm:$0xff]
        %v158 = vld [vmem:[%s114 + $0x80] sm:$0xff]
        %v159 = vld [vmem:[%s114 + $0x88] sm:$0xff]
        %v160 = vld [vmem:[%s114 + $0x90] sm:$0xff]
        %v161 = vld [vmem:[%s114 + $0x98] sm:$0xff]
        %v162 = vld [vmem:[%s114 + $0xa0] sm:$0xff]
        %v163 = vld [vmem:[%s114 + $0xa8] sm:$0xff]
        %v164 = vld [vmem:[%s114 + $0xb0] sm:$0xff]
        %v165 = vld [vmem:[%s114 + $0xb8] sm:$0xff]
        %v166 = vld [vmem:[%s114 + $0xc0] sm:$0xff]
        %v167 = vld [vmem:[%s114 + $0xc8] sm:$0xff]
        %v168 = vld [vmem:[%s114 + $0xd0] sm:$0xff]
        %v169 = vld [vmem:[%s114 + $0xd8] sm:$0xff]
        %v170 = vld [vmem:[%s114 + $0xe0] sm:$0xff]
        %v171 = vld [vmem:[%s114 + $0xe8] sm:$0xff]
        %v172 = vld [vmem:[%s114 + $0xf0] sm:$0xff]
        %v173 = vld [vmem:[%s114 + $0xf8] sm:$0xff]
        %v174 = vld [vmem:[%s114 + $0x100] sm:$0xff]
        %v175 = vld [vmem:[%s114 + $0x108] sm:$0xff]
        %v176 = vld [vmem:[%s114 + $0x110] sm:$0xff]
        %v177 = vld [vmem:[%s114 + $0x118] sm:$0xff]
        %v178 = vld [vmem:[%s114 + $0x120] sm:$0xff]
        %v179 = vld [vmem:[%s114 + $0x128] sm:$0xff]
        %v180 = vld [vmem:[%s114 + $0x130] sm:$0xff]
        %v181 = vld [vmem:[%s114 + $0x138] sm:$0xff]
        %v182 = vld [vmem:[%s114 + $0x140] sm:$0xff]
        %v183 = vld [vmem:[%s114 + $0x148] sm:$0xff]
        %v184 = vld [vmem:[%s114 + $0x150] sm:$0xff]
        %v185 = vld [vmem:[%s114 + $0x158] sm:$0xff]
        %v186 = vld [vmem:[%s114 + $0x160] sm:$0xff]
        %v187 = vld [vmem:[%s114 + $0x168] sm:$0xff]
        %v188 = vld [vmem:[%s114 + $0x170] sm:$0xff]
        %v189 = vld [vmem:[%s114 + $0x178] sm:$0xff]
        %v190 = vld [vmem:[%s114 + $0x180] sm:$0xff]
        %v191 = vld [vmem:[%s114 + $0x188] sm:$0xff]
        %v192 = vld [vmem:[%s114 + $0x190] sm:$0xff]
        %v193 = vld [vmem:[%s114 + $0x198] sm:$0xff]
        %v194 = vld [vmem:[%s114 + $0x1a0] sm:$0xff]
        %v195 = vld [vmem:[%s114 + $0x1a8] sm:$0xff]
        %v196 = vld [vmem:[%s114 + $0x1b0] sm:$0xff]
        %v197 = vld [vmem:[%s114 + $0x1b8] sm:$0xff]
        %v198 = vld [vmem:[%s114 + $0x1c0] sm:$0xff]
        %v199 = vld [vmem:[%s114 + $0x1c8] sm:$0xff]
        %v200 = vld [vmem:[%s114 + $0x1d0] sm:$0xff]
        %v201 = vld [vmem:[%s114 + $0x1d8] sm:$0xff]
        %v202 = vld [vmem:[%s114 + $0x1e0] sm:$0xff]
        %v203 = vld [vmem:[%s114 + $0x1e8] sm:$0xff]
        %v204 = vld [vmem:[%s114 + $0x1f0] sm:$0xff]
        %v205 = vld [vmem:[%s114 + $0x1f8] sm:$0xff]
        %270 = vrot.lane.b32.xlu0 %v142, 1
        %v271 = vpop.permute.xlu0 %270
        %272 = vrot.lane.b32.xlu0 %v143, 1
        %v273 = vpop.permute.xlu0 %272
        %274 = vrot.lane.b32.xlu0 %v144, 1
        %v275 = vpop.permute.xlu0 %274
        %276 = vrot.lane.b32.xlu0 %v145, 1
        %v277 = vpop.permute.xlu0 %276
        %278 = vrot.lane.b32.xlu0 %v146, 1
        %v279 = vpop.permute.xlu0 %278
        %280 = vrot.lane.b32.xlu0 %v147, 1
        %v281 = vpop.permute.xlu0 %280
        %282 = vrot.lane.b32.xlu0 %v148, 1
        %v283 = vpop.permute.xlu0 %282
        %284 = vrot.lane.b32.xlu0 %v149, 1
        %v285 = vpop.permute.xlu0 %284
        %286 = vrot.lane.b32.xlu0 %v150, 1
        %v287 = vpop.permute.xlu0 %286
        %288 = vrot.lane.b32.xlu0 %v151, 1
        %v289 = vpop.permute.xlu0 %288
        %290 = vrot.lane.b32.xlu0 %v152, 1
        %v291 = vpop.permute.xlu0 %290
        %292 = vrot.lane.b32.xlu0 %v153, 1
        %v293 = vpop.permute.xlu0 %292
        %294 = vrot.lane.b32.xlu0 %v154, 1
        %v295 = vpop.permute.xlu0 %294
        %296 = vrot.lane.b32.xlu0 %v155, 1
        %v297 = vpop.permute.xlu0 %296
        %298 = vrot.lane.b32.xlu0 %v156, 1
        %v299 = vpop.permute.xlu0 %298
        %300 = vrot.lane.b32.xlu0 %v157, 1
        %v301 = vpop.permute.xlu0 %300
        %302 = vrot.lane.b32.xlu0 %v158, 1
        %v303 = vpop.permute.xlu0 %302
        %304 = vrot.lane.b32.xlu0 %v159, 1
        %v305 = vpop.permute.xlu0 %304
        %306 = vrot.lane.b32.xlu0 %v160, 1
        %v307 = vpop.permute.xlu0 %306
        %308 = vrot.lane.b32.xlu0 %v161, 1
        %v309 = vpop.permute.xlu0 %308
        %310 = vrot.lane.b32.xlu0 %v162, 1
        %v311 = vpop.permute.xlu0 %310
        %312 = vrot.lane.b32.xlu0 %v163, 1
        %v313 = vpop.permute.xlu0 %312
        %314 = vrot.lane.b32.xlu0 %v164, 1
        %v315 = vpop.permute.xlu0 %314
        %316 = vrot.lane.b32.xlu0 %v165, 1
        %v317 = vpop.permute.xlu0 %316
        %318 = vrot.lane.b32.xlu0 %v166, 1
        %v319 = vpop.permute.xlu0 %318
        %320 = vrot.lane.b32.xlu0 %v167, 1
        %v321 = vpop.permute.xlu0 %320
        %322 = vrot.lane.b32.xlu0 %v168, 1
        %v323 = vpop.permute.xlu0 %322
        %324 = vrot.lane.b32.xlu0 %v169, 1
        %v325 = vpop.permute.xlu0 %324
        %326 = vrot.lane.b32.xlu0 %v170, 1
        %v327 = vpop.permute.xlu0 %326
        %328 = vrot.lane.b32.xlu0 %v171, 1
        %v329 = vpop.permute.xlu0 %328
        %330 = vrot.lane.b32.xlu0 %v172, 1
        %v331 = vpop.permute.xlu0 %330
        %332 = vrot.lane.b32.xlu0 %v173, 1
        %v333 = vpop.permute.xlu0 %332
        %334 = vrot.lane.b32.xlu0 %v174, 1
        %v335 = vpop.permute.xlu0 %334
        %336 = vrot.lane.b32.xlu0 %v175, 1
        %v337 = vpop.permute.xlu0 %336
        %338 = vrot.lane.b32.xlu0 %v176, 1
        %v339 = vpop.permute.xlu0 %338
        %340 = vrot.lane.b32.xlu0 %v177, 1
        %v341 = vpop.permute.xlu0 %340
        %342 = vrot.lane.b32.xlu0 %v178, 1
        %v343 = vpop.permute.xlu0 %342
        %344 = vrot.lane.b32.xlu0 %v179, 1
        %v345 = vpop.permute.xlu0 %344
        %346 = vrot.lane.b32.xlu0 %v180, 1
        %v347 = vpop.permute.xlu0 %346
        %348 = vrot.lane.b32.xlu0 %v181, 1
        %v349 = vpop.permute.xlu0 %348
        %350 = vrot.lane.b32.xlu0 %v182, 1
        %v351 = vpop.permute.xlu0 %350
        %352 = vrot.lane.b32.xlu0 %v183, 1
        %v353 = vpop.permute.xlu0 %352
        %354 = vrot.lane.b32.xlu0 %v184, 1
        %v355 = vpop.permute.xlu0 %354
        %356 = vrot.lane.b32.xlu0 %v185, 1
        %v357 = vpop.permute.xlu0 %356
        %358 = vrot.lane.b32.xlu0 %v186, 1
        %v359 = vpop.permute.xlu0 %358
        %360 = vrot.lane.b32.xlu0 %v187, 1
        %v361 = vpop.permute.xlu0 %360
        %362 = vrot.lane.b32.xlu0 %v188, 1
        %v363 = vpop.permute.xlu0 %362
        %364 = vrot.lane.b32.xlu0 %v189, 1
        %v365 = vpop.permute.xlu0 %364
        %366 = vrot.lane.b32.xlu0 %v190, 1
        %v367 = vpop.permute.xlu0 %366
        %368 = vrot.lane.b32.xlu0 %v191, 1
        %v369 = vpop.permute.xlu0 %368
        %370 = vrot.lane.b32.xlu0 %v192, 1
        %v371 = vpop.permute.xlu0 %370
        %372 = vrot.lane.b32.xlu0 %v193, 1
        %v373 = vpop.permute.xlu0 %372
        %374 = vrot.lane.b32.xlu0 %v194, 1
        %v375 = vpop.permute.xlu0 %374
        %376 = vrot.lane.b32.xlu0 %v195, 1
        %v377 = vpop.permute.xlu0 %376
        %378 = vrot.lane.b32.xlu0 %v196, 1
        %v379 = vpop.permute.xlu0 %378
        %380 = vrot.lane.b32.xlu0 %v197, 1
        %v381 = vpop.permute.xlu0 %380
        %382 = vrot.lane.b32.xlu0 %v198, 1
        %v383 = vpop.permute.xlu0 %382
        %384 = vrot.lane.b32.xlu0 %v199, 1
        %v385 = vpop.permute.xlu0 %384
        %386 = vrot.lane.b32.xlu0 %v200, 1
        %v387 = vpop.permute.xlu0 %386
        %388 = vrot.lane.b32.xlu0 %v201, 1
        %v389 = vpop.permute.xlu0 %388
        %390 = vrot.lane.b32.xlu0 %v202, 1
        %v391 = vpop.permute.xlu0 %390
        %392 = vrot.lane.b32.xlu0 %v203, 1
        %v393 = vpop.permute.xlu0 %392
        %394 = vrot.lane.b32.xlu0 %v204, 1
        %v395 = vpop.permute.xlu0 %394
        %396 = vrot.lane.b32.xlu0 %v205, 1
        %v397 = vpop.permute.xlu0 %396
        %s462 = scalar_lea.vmem %s140, 24
        %vm463 = vcmask 138248
        %464 = vst.msk [vmem:[%s462 + $0x1] sm:$0xff] %vm463, %v271
        %465 = vst.msk [vmem:[%s462 + $0x9] sm:$0xff] %vm463, %v273
        %466 = vst.msk [vmem:[%s462 + $0x19] sm:$0xff] %vm463, %v275
        %467 = vst.msk [vmem:[%s462 + $0x21] sm:$0xff] %vm463, %v277
        %468 = vst.msk [vmem:[%s462 + $0x31] sm:$0xff] %vm463, %v279
        %469 = vst.msk [vmem:[%s462 + $0x39] sm:$0xff] %vm463, %v281
        %470 = vst.msk [vmem:[%s462 + $0x49] sm:$0xff] %vm463, %v283
        %471 = vst.msk [vmem:[%s462 + $0x51] sm:$0xff] %vm463, %v285
        %472 = vst.msk [vmem:[%s462 + $0x61] sm:$0xff] %vm463, %v287
        %473 = vst.msk [vmem:[%s462 + $0x69] sm:$0xff] %vm463, %v289
        %474 = vst.msk [vmem:[%s462 + $0x79] sm:$0xff] %vm463, %v291
        %475 = vst.msk [vmem:[%s462 + $0x81] sm:$0xff] %vm463, %v293
        %476 = vst.msk [vmem:[%s462 + $0x91] sm:$0xff] %vm463, %v295
        %477 = vst.msk [vmem:[%s462 + $0x99] sm:$0xff] %vm463, %v297
        %478 = vst.msk [vmem:[%s462 + $0xa9] sm:$0xff] %vm463, %v299
        %479 = vst.msk [vmem:[%s462 + $0xb1] sm:$0xff] %vm463, %v301
        %480 = vst.msk [vmem:[%s462 + $0xf1] sm:$0xff] %vm463, %v303
        %481 = vst.msk [vmem:[%s462 + $0xf9] sm:$0xff] %vm463, %v305
        %482 = vst.msk [vmem:[%s462 + $0x109] sm:$0xff] %vm463, %v307
        %483 = vst.msk [vmem:[%s462 + $0x111] sm:$0xff] %vm463, %v309
        %484 = vst.msk [vmem:[%s462 + $0x121] sm:$0xff] %vm463, %v311
        %485 = vst.msk [vmem:[%s462 + $0x129] sm:$0xff] %vm463, %v313
        %486 = vst.msk [vmem:[%s462 + $0x139] sm:$0xff] %vm463, %v315
        %487 = vst.msk [vmem:[%s462 + $0x141] sm:$0xff] %vm463, %v317
        %488 = vst.msk [vmem:[%s462 + $0x151] sm:$0xff] %vm463, %v319
        %489 = vst.msk [vmem:[%s462 + $0x159] sm:$0xff] %vm463, %v321
        %490 = vst.msk [vmem:[%s462 + $0x169] sm:$0xff] %vm463, %v323
        %491 = vst.msk [vmem:[%s462 + $0x171] sm:$0xff] %vm463, %v325
        %492 = vst.msk [vmem:[%s462 + $0x181] sm:$0xff] %vm463, %v327
        %493 = vst.msk [vmem:[%s462 + $0x189] sm:$0xff] %vm463, %v329
        %494 = vst.msk [vmem:[%s462 + $0x199] sm:$0xff] %vm463, %v331
        %495 = vst.msk [vmem:[%s462 + $0x1a1] sm:$0xff] %vm463, %v333
        %496 = vst.msk [vmem:[%s462 + $0x1e1] sm:$0xff] %vm463, %v335
        %497 = vst.msk [vmem:[%s462 + $0x1e9] sm:$0xff] %vm463, %v337
        %498 = vst.msk [vmem:[%s462 + $0x1f9] sm:$0xff] %vm463, %v339
        %499 = vst.msk [vmem:[%s462 + $0x201] sm:$0xff] %vm463, %v341
        %500 = vst.msk [vmem:[%s462 + $0x211] sm:$0xff] %vm463, %v343
        %501 = vst.msk [vmem:[%s462 + $0x219] sm:$0xff] %vm463, %v345
        %502 = vst.msk [vmem:[%s462 + $0x229] sm:$0xff] %vm463, %v347
        %503 = vst.msk [vmem:[%s462 + $0x231] sm:$0xff] %vm463, %v349
        %504 = vst.msk [vmem:[%s462 + $0x241] sm:$0xff] %vm463, %v351
        %505 = vst.msk [vmem:[%s462 + $0x249] sm:$0xff] %vm463, %v353
        %506 = vst.msk [vmem:[%s462 + $0x259] sm:$0xff] %vm463, %v355
        %507 = vst.msk [vmem:[%s462 + $0x261] sm:$0xff] %vm463, %v357
        %508 = vst.msk [vmem:[%s462 + $0x271] sm:$0xff] %vm463, %v359
        %509 = vst.msk [vmem:[%s462 + $0x279] sm:$0xff] %vm463, %v361
        %510 = vst.msk [vmem:[%s462 + $0x289] sm:$0xff] %vm463, %v363
        %511 = vst.msk [vmem:[%s462 + $0x291] sm:$0xff] %vm463, %v365
        %512 = vst.msk [vmem:[%s462 + $0x2d1] sm:$0xff] %vm463, %v367
        %513 = vst.msk [vmem:[%s462 + $0x2d9] sm:$0xff] %vm463, %v369
        %514 = vst.msk [vmem:[%s462 + $0x2e9] sm:$0xff] %vm463, %v371
        %515 = vst.msk [vmem:[%s462 + $0x2f1] sm:$0xff] %vm463, %v373
        %516 = vst.msk [vmem:[%s462 + $0x301] sm:$0xff] %vm463, %v375
        %517 = vst.msk [vmem:[%s462 + $0x309] sm:$0xff] %vm463, %v377
        %518 = vst.msk [vmem:[%s462 + $0x319] sm:$0xff] %vm463, %v379
        %519 = vst.msk [vmem:[%s462 + $0x321] sm:$0xff] %vm463, %v381
        %520 = vst.msk [vmem:[%s462 + $0x331] sm:$0xff] %vm463, %v383
        %521 = vst.msk [vmem:[%s462 + $0x339] sm:$0xff] %vm463, %v385
        %522 = vst.msk [vmem:[%s462 + $0x349] sm:$0xff] %vm463, %v387
        %523 = vst.msk [vmem:[%s462 + $0x351] sm:$0xff] %vm463, %v389
        %524 = vst.msk [vmem:[%s462 + $0x361] sm:$0xff] %vm463, %v391
        %525 = vst.msk [vmem:[%s462 + $0x369] sm:$0xff] %vm463, %v393
        %526 = vst.msk [vmem:[%s462 + $0x379] sm:$0xff] %vm463, %v395
        %527 = vst.msk [vmem:[%s462 + $0x381] sm:$0xff] %vm463, %v397
        %v528 = vld [vmem:[%s114] sm:$0xff]
        %v529 = vld [vmem:[%s114 + $0x8] sm:$0xff]
        %v530 = vld [vmem:[%s114 + $0x10] sm:$0xff]
        %v531 = vld [vmem:[%s114 + $0x18] sm:$0xff]
        %v532 = vld [vmem:[%s114 + $0x20] sm:$0xff]
        %v533 = vld [vmem:[%s114 + $0x28] sm:$0xff]
        %v534 = vld [vmem:[%s114 + $0x30] sm:$0xff]
        %v535 = vld [vmem:[%s114 + $0x38] sm:$0xff]
        %v536 = vld [vmem:[%s114 + $0x40] sm:$0xff]
        %v537 = vld [vmem:[%s114 + $0x48] sm:$0xff]
        %v538 = vld [vmem:[%s114 + $0x50] sm:$0xff]
        %v539 = vld [vmem:[%s114 + $0x58] sm:$0xff]
        %v540 = vld [vmem:[%s114 + $0x60] sm:$0xff]
        %v541 = vld [vmem:[%s114 + $0x68] sm:$0xff]
        %v542 = vld [vmem:[%s114 + $0x70] sm:$0xff]
        %v543 = vld [vmem:[%s114 + $0x78] sm:$0xff]
        %v544 = vld [vmem:[%s114 + $0x80] sm:$0xff]
        %v545 = vld [vmem:[%s114 + $0x88] sm:$0xff]
        %v546 = vld [vmem:[%s114 + $0x90] sm:$0xff]
        %v547 = vld [vmem:[%s114 + $0x98] sm:$0xff]
        %v548 = vld [vmem:[%s114 + $0xa0] sm:$0xff]
        %v549 = vld [vmem:[%s114 + $0xa8] sm:$0xff]
        %v550 = vld [vmem:[%s114 + $0xb0] sm:$0xff]
        %v551 = vld [vmem:[%s114 + $0xb8] sm:$0xff]
        %v552 = vld [vmem:[%s114 + $0xc0] sm:$0xff]
        %v553 = vld [vmem:[%s114 + $0xc8] sm:$0xff]
        %v554 = vld [vmem:[%s114 + $0xd0] sm:$0xff]
        %v555 = vld [vmem:[%s114 + $0xd8] sm:$0xff]
        %v556 = vld [vmem:[%s114 + $0xe0] sm:$0xff]
        %v557 = vld [vmem:[%s114 + $0xe8] sm:$0xff]
        %v558 = vld [vmem:[%s114 + $0xf0] sm:$0xff]
        %v559 = vld [vmem:[%s114 + $0xf8] sm:$0xff]
        %v560 = vld [vmem:[%s114 + $0x100] sm:$0xff]
        %v561 = vld [vmem:[%s114 + $0x108] sm:$0xff]
        %v562 = vld [vmem:[%s114 + $0x110] sm:$0xff]
        %v563 = vld [vmem:[%s114 + $0x118] sm:$0xff]
        %v564 = vld [vmem:[%s114 + $0x120] sm:$0xff]
        %v565 = vld [vmem:[%s114 + $0x128] sm:$0xff]
        %v566 = vld [vmem:[%s114 + $0x130] sm:$0xff]
        %v567 = vld [vmem:[%s114 + $0x138] sm:$0xff]
        %v568 = vld [vmem:[%s114 + $0x140] sm:$0xff]
        %v569 = vld [vmem:[%s114 + $0x148] sm:$0xff]
        %v570 = vld [vmem:[%s114 + $0x150] sm:$0xff]
        %v571 = vld [vmem:[%s114 + $0x158] sm:$0xff]
        %v572 = vld [vmem:[%s114 + $0x160] sm:$0xff]
        %v573 = vld [vmem:[%s114 + $0x168] sm:$0xff]
        %v574 = vld [vmem:[%s114 + $0x170] sm:$0xff]
        %v575 = vld [vmem:[%s114 + $0x178] sm:$0xff]
        %v576 = vld [vmem:[%s114 + $0x180] sm:$0xff]
        %v577 = vld [vmem:[%s114 + $0x188] sm:$0xff]
        %v578 = vld [vmem:[%s114 + $0x190] sm:$0xff]
        %v579 = vld [vmem:[%s114 + $0x198] sm:$0xff]
        %v580 = vld [vmem:[%s114 + $0x1a0] sm:$0xff]
        %v581 = vld [vmem:[%s114 + $0x1a8] sm:$0xff]
        %v582 = vld [vmem:[%s114 + $0x1b0] sm:$0xff]
        %v583 = vld [vmem:[%s114 + $0x1b8] sm:$0xff]
        %v584 = vld [vmem:[%s114 + $0x1c0] sm:$0xff]
        %v585 = vld [vmem:[%s114 + $0x1c8] sm:$0xff]
        %v586 = vld [vmem:[%s114 + $0x1d0] sm:$0xff]
        %v587 = vld [vmem:[%s114 + $0x1d8] sm:$0xff]
        %v588 = vld [vmem:[%s114 + $0x1e0] sm:$0xff]
        %v589 = vld [vmem:[%s114 + $0x1e8] sm:$0xff]
        %v590 = vld [vmem:[%s114 + $0x1f0] sm:$0xff]
        %v591 = vld [vmem:[%s114 + $0x1f8] sm:$0xff]
        %656 = vrot.lane.b32.xlu0 %v528, 113
        %v657 = vpop.permute.xlu0 %656
        %658 = vrot.lane.b32.xlu0 %v529, 113
        %v659 = vpop.permute.xlu0 %658
        %660 = vrot.lane.b32.xlu0 %v530, 113
        %v661 = vpop.permute.xlu0 %660
        %662 = vrot.lane.b32.xlu0 %v531, 113
        %v663 = vpop.permute.xlu0 %662
        %664 = vrot.lane.b32.xlu0 %v532, 113
        %v665 = vpop.permute.xlu0 %664
        %666 = vrot.lane.b32.xlu0 %v533, 113
        %v667 = vpop.permute.xlu0 %666
        %668 = vrot.lane.b32.xlu0 %v534, 113
        %v669 = vpop.permute.xlu0 %668
        %670 = vrot.lane.b32.xlu0 %v535, 113
        %v671 = vpop.permute.xlu0 %670
        %672 = vrot.lane.b32.xlu0 %v536, 113
        %v673 = vpop.permute.xlu0 %672
        %674 = vrot.lane.b32.xlu0 %v537, 113
        %v675 = vpop.permute.xlu0 %674
        %676 = vrot.lane.b32.xlu0 %v538, 113
        %v677 = vpop.permute.xlu0 %676
        %678 = vrot.lane.b32.xlu0 %v539, 113
        %v679 = vpop.permute.xlu0 %678
        %680 = vrot.lane.b32.xlu0 %v540, 113
        %v681 = vpop.permute.xlu0 %680
        %682 = vrot.lane.b32.xlu0 %v541, 113
        %v683 = vpop.permute.xlu0 %682
        %684 = vrot.lane.b32.xlu0 %v542, 113
        %v685 = vpop.permute.xlu0 %684
        %686 = vrot.lane.b32.xlu0 %v543, 113
        %v687 = vpop.permute.xlu0 %686
        %688 = vrot.lane.b32.xlu0 %v544, 113
        %v689 = vpop.permute.xlu0 %688
        %690 = vrot.lane.b32.xlu0 %v545, 113
        %v691 = vpop.permute.xlu0 %690
        %692 = vrot.lane.b32.xlu0 %v546, 113
        %v693 = vpop.permute.xlu0 %692
        %694 = vrot.lane.b32.xlu0 %v547, 113
        %v695 = vpop.permute.xlu0 %694
        %696 = vrot.lane.b32.xlu0 %v548, 113
        %v697 = vpop.permute.xlu0 %696
        %698 = vrot.lane.b32.xlu0 %v549, 113
        %v699 = vpop.permute.xlu0 %698
        %700 = vrot.lane.b32.xlu0 %v550, 113
        %v701 = vpop.permute.xlu0 %700
        %702 = vrot.lane.b32.xlu0 %v551, 113
        %v703 = vpop.permute.xlu0 %702
        %704 = vrot.lane.b32.xlu0 %v552, 113
        %v705 = vpop.permute.xlu0 %704
        %706 = vrot.lane.b32.xlu0 %v553, 113
        %v707 = vpop.permute.xlu0 %706
        %708 = vrot.lane.b32.xlu0 %v554, 113
        %v709 = vpop.permute.xlu0 %708
        %710 = vrot.lane.b32.xlu0 %v555, 113
        %v711 = vpop.permute.xlu0 %710
        %712 = vrot.lane.b32.xlu0 %v556, 113
        %v713 = vpop.permute.xlu0 %712
        %714 = vrot.lane.b32.xlu0 %v557, 113
        %v715 = vpop.permute.xlu0 %714
        %716 = vrot.lane.b32.xlu0 %v558, 113
        %v717 = vpop.permute.xlu0 %716
        %718 = vrot.lane.b32.xlu0 %v559, 113
        %v719 = vpop.permute.xlu0 %718
        %720 = vrot.lane.b32.xlu0 %v560, 113
        %v721 = vpop.permute.xlu0 %720
        %722 = vrot.lane.b32.xlu0 %v561, 113
        %v723 = vpop.permute.xlu0 %722
        %724 = vrot.lane.b32.xlu0 %v562, 113
        %v725 = vpop.permute.xlu0 %724
        %726 = vrot.lane.b32.xlu0 %v563, 113
        %v727 = vpop.permute.xlu0 %726
        %728 = vrot.lane.b32.xlu0 %v564, 113
        %v729 = vpop.permute.xlu0 %728
        %730 = vrot.lane.b32.xlu0 %v565, 113
        %v731 = vpop.permute.xlu0 %730
        %732 = vrot.lane.b32.xlu0 %v566, 113
        %v733 = vpop.permute.xlu0 %732
        %734 = vrot.lane.b32.xlu0 %v567, 113
        %v735 = vpop.permute.xlu0 %734
        %736 = vrot.lane.b32.xlu0 %v568, 113
        %v737 = vpop.permute.xlu0 %736
        %738 = vrot.lane.b32.xlu0 %v569, 113
        %v739 = vpop.permute.xlu0 %738
        %740 = vrot.lane.b32.xlu0 %v570, 113
        %v741 = vpop.permute.xlu0 %740
        %742 = vrot.lane.b32.xlu0 %v571, 113
        %v743 = vpop.permute.xlu0 %742
        %744 = vrot.lane.b32.xlu0 %v572, 113
        %v745 = vpop.permute.xlu0 %744
        %746 = vrot.lane.b32.xlu0 %v573, 113
        %v747 = vpop.permute.xlu0 %746
        %748 = vrot.lane.b32.xlu0 %v574, 113
        %v749 = vpop.permute.xlu0 %748
        %750 = vrot.lane.b32.xlu0 %v575, 113
        %v751 = vpop.permute.xlu0 %750
        %752 = vrot.lane.b32.xlu0 %v576, 113
        %v753 = vpop.permute.xlu0 %752
        %754 = vrot.lane.b32.xlu0 %v577, 113
        %v755 = vpop.permute.xlu0 %754
        %756 = vrot.lane.b32.xlu0 %v578, 113
        %v757 = vpop.permute.xlu0 %756
        %758 = vrot.lane.b32.xlu0 %v579, 113
        %v759 = vpop.permute.xlu0 %758
        %760 = vrot.lane.b32.xlu0 %v580, 113
        %v761 = vpop.permute.xlu0 %760
        %762 = vrot.lane.b32.xlu0 %v581, 113
        %v763 = vpop.permute.xlu0 %762
        %764 = vrot.lane.b32.xlu0 %v582, 113
        %v765 = vpop.permute.xlu0 %764
        %766 = vrot.lane.b32.xlu0 %v583, 113
        %v767 = vpop.permute.xlu0 %766
        %768 = vrot.lane.b32.xlu0 %v584, 113
        %v769 = vpop.permute.xlu0 %768
        %770 = vrot.lane.b32.xlu0 %v585, 113
        %v771 = vpop.permute.xlu0 %770
        %772 = vrot.lane.b32.xlu0 %v586, 113
        %v773 = vpop.permute.xlu0 %772
        %774 = vrot.lane.b32.xlu0 %v587, 113
        %v775 = vpop.permute.xlu0 %774
        %776 = vrot.lane.b32.xlu0 %v588, 113
        %v777 = vpop.permute.xlu0 %776
        %778 = vrot.lane.b32.xlu0 %v589, 113
        %v779 = vpop.permute.xlu0 %778
        %780 = vrot.lane.b32.xlu0 %v590, 113
        %v781 = vpop.permute.xlu0 %780
        %782 = vrot.lane.b32.xlu0 %v591, 113
        %v783 = vpop.permute.xlu0 %782
        %vm848 = vcmask 7168
        %849 = vst.msk [vmem:[%s462 + $0x1] sm:$0xff] %vm848, %v657
        %850 = vst.msk [vmem:[%s462 + $0x9] sm:$0xff] %vm848, %v659
        %851 = vst.msk [vmem:[%s462 + $0x19] sm:$0xff] %vm848, %v661
        %852 = vst.msk [vmem:[%s462 + $0x21] sm:$0xff] %vm848, %v663
        %853 = vst.msk [vmem:[%s462 + $0x31] sm:$0xff] %vm848, %v665
        %854 = vst.msk [vmem:[%s462 + $0x39] sm:$0xff] %vm848, %v667
        %855 = vst.msk [vmem:[%s462 + $0x49] sm:$0xff] %vm848, %v669
        %856 = vst.msk [vmem:[%s462 + $0x51] sm:$0xff] %vm848, %v671
        %857 = vst.msk [vmem:[%s462 + $0x61] sm:$0xff] %vm848, %v673
        %858 = vst.msk [vmem:[%s462 + $0x69] sm:$0xff] %vm848, %v675
        %859 = vst.msk [vmem:[%s462 + $0x79] sm:$0xff] %vm848, %v677
        %860 = vst.msk [vmem:[%s462 + $0x81] sm:$0xff] %vm848, %v679
        %861 = vst.msk [vmem:[%s462 + $0x91] sm:$0xff] %vm848, %v681
        %862 = vst.msk [vmem:[%s462 + $0x99] sm:$0xff] %vm848, %v683
        %863 = vst.msk [vmem:[%s462 + $0xa9] sm:$0xff] %vm848, %v685
        %864 = vst.msk [vmem:[%s462 + $0xb1] sm:$0xff] %vm848, %v687
        %865 = vst.msk [vmem:[%s462 + $0xf1] sm:$0xff] %vm848, %v689
        %866 = vst.msk [vmem:[%s462 + $0xf9] sm:$0xff] %vm848, %v691
        %867 = vst.msk [vmem:[%s462 + $0x109] sm:$0xff] %vm848, %v693
        %868 = vst.msk [vmem:[%s462 + $0x111] sm:$0xff] %vm848, %v695
        %869 = vst.msk [vmem:[%s462 + $0x121] sm:$0xff] %vm848, %v697
        %870 = vst.msk [vmem:[%s462 + $0x129] sm:$0xff] %vm848, %v699
        %871 = vst.msk [vmem:[%s462 + $0x139] sm:$0xff] %vm848, %v701
        %872 = vst.msk [vmem:[%s462 + $0x141] sm:$0xff] %vm848, %v703
        %873 = vst.msk [vmem:[%s462 + $0x151] sm:$0xff] %vm848, %v705
        %874 = vst.msk [vmem:[%s462 + $0x159] sm:$0xff] %vm848, %v707
        %875 = vst.msk [vmem:[%s462 + $0x169] sm:$0xff] %vm848, %v709
        %876 = vst.msk [vmem:[%s462 + $0x171] sm:$0xff] %vm848, %v711
        %877 = vst.msk [vmem:[%s462 + $0x181] sm:$0xff] %vm848, %v713
        %878 = vst.msk [vmem:[%s462 + $0x189] sm:$0xff] %vm848, %v715
        %879 = vst.msk [vmem:[%s462 + $0x199] sm:$0xff] %vm848, %v717
        %880 = vst.msk [vmem:[%s462 + $0x1a1] sm:$0xff] %vm848, %v719
        %881 = vst.msk [vmem:[%s462 + $0x1e1] sm:$0xff] %vm848, %v721
        %882 = vst.msk [vmem:[%s462 + $0x1e9] sm:$0xff] %vm848, %v723
        %883 = vst.msk [vmem:[%s462 + $0x1f9] sm:$0xff] %vm848, %v725
        %884 = vst.msk [vmem:[%s462 + $0x201] sm:$0xff] %vm848, %v727
        %885 = vst.msk [vmem:[%s462 + $0x211] sm:$0xff] %vm848, %v729
        %886 = vst.msk [vmem:[%s462 + $0x219] sm:$0xff] %vm848, %v731
        %887 = vst.msk [vmem:[%s462 + $0x229] sm:$0xff] %vm848, %v733
        %888 = vst.msk [vmem:[%s462 + $0x231] sm:$0xff] %vm848, %v735
        %889 = vst.msk [vmem:[%s462 + $0x241] sm:$0xff] %vm848, %v737
        %890 = vst.msk [vmem:[%s462 + $0x249] sm:$0xff] %vm848, %v739
        %891 = vst.msk [vmem:[%s462 + $0x259] sm:$0xff] %vm848, %v741
        %892 = vst.msk [vmem:[%s462 + $0x261] sm:$0xff] %vm848, %v743
        %893 = vst.msk [vmem:[%s462 + $0x271] sm:$0xff] %vm848, %v745
        %894 = vst.msk [vmem:[%s462 + $0x279] sm:$0xff] %vm848, %v747
        %895 = vst.msk [vmem:[%s462 + $0x289] sm:$0xff] %vm848, %v749
        %896 = vst.msk [vmem:[%s462 + $0x291] sm:$0xff] %vm848, %v751
        %897 = vst.msk [vmem:[%s462 + $0x2d1] sm:$0xff] %vm848, %v753
        %898 = vst.msk [vmem:[%s462 + $0x2d9] sm:$0xff] %vm848, %v755
        %899 = vst.msk [vmem:[%s462 + $0x2e9] sm:$0xff] %vm848, %v757
        %900 = vst.msk [vmem:[%s462 + $0x2f1] sm:$0xff] %vm848, %v759
        %901 = vst.msk [vmem:[%s462 + $0x301] sm:$0xff] %vm848, %v761
        %902 = vst.msk [vmem:[%s462 + $0x309] sm:$0xff] %vm848, %v763
        %903 = vst.msk [vmem:[%s462 + $0x319] sm:$0xff] %vm848, %v765
        %904 = vst.msk [vmem:[%s462 + $0x321] sm:$0xff] %vm848, %v767
        %905 = vst.msk [vmem:[%s462 + $0x331] sm:$0xff] %vm848, %v769
        %906 = vst.msk [vmem:[%s462 + $0x339] sm:$0xff] %vm848, %v771
        %907 = vst.msk [vmem:[%s462 + $0x349] sm:$0xff] %vm848, %v773
        %908 = vst.msk [vmem:[%s462 + $0x351] sm:$0xff] %vm848, %v775
        %909 = vst.msk [vmem:[%s462 + $0x361] sm:$0xff] %vm848, %v777
        %910 = vst.msk [vmem:[%s462 + $0x369] sm:$0xff] %vm848, %v779
        %911 = vst.msk [vmem:[%s462 + $0x379] sm:$0xff] %vm848, %v781
        %912 = vst.msk [vmem:[%s462 + $0x381] sm:$0xff] %vm848, %v783
        %v913 = vld [vmem:[%s114] sm:$0xff]
        %v914 = vld [vmem:[%s114 + $0x8] sm:$0xff]
        %v915 = vld [vmem:[%s114 + $0x10] sm:$0xff]
        %v916 = vld [vmem:[%s114 + $0x18] sm:$0xff]
        %v917 = vld [vmem:[%s114 + $0x20] sm:$0xff]
        %v918 = vld [vmem:[%s114 + $0x28] sm:$0xff]
        %v919 = vld [vmem:[%s114 + $0x30] sm:$0xff]
        %v920 = vld [vmem:[%s114 + $0x38] sm:$0xff]
        %v921 = vld [vmem:[%s114 + $0x40] sm:$0xff]
        %v922 = vld [vmem:[%s114 + $0x48] sm:$0xff]
        %v923 = vld [vmem:[%s114 + $0x50] sm:$0xff]
        %v924 = vld [vmem:[%s114 + $0x58] sm:$0xff]
        %v925 = vld [vmem:[%s114 + $0x60] sm:$0xff]
        %v926 = vld [vmem:[%s114 + $0x68] sm:$0xff]
        %v927 = vld [vmem:[%s114 + $0x70] sm:$0xff]
        %v928 = vld [vmem:[%s114 + $0x78] sm:$0xff]
        %v929 = vld [vmem:[%s114 + $0x80] sm:$0xff]
        %v930 = vld [vmem:[%s114 + $0x88] sm:$0xff]
        %v931 = vld [vmem:[%s114 + $0x90] sm:$0xff]
        %v932 = vld [vmem:[%s114 + $0x98] sm:$0xff]
        %v933 = vld [vmem:[%s114 + $0xa0] sm:$0xff]
        %v934 = vld [vmem:[%s114 + $0xa8] sm:$0xff]
        %v935 = vld [vmem:[%s114 + $0xb0] sm:$0xff]
        %v936 = vld [vmem:[%s114 + $0xb8] sm:$0xff]
        %v937 = vld [vmem:[%s114 + $0xc0] sm:$0xff]
        %v938 = vld [vmem:[%s114 + $0xc8] sm:$0xff]
        %v939 = vld [vmem:[%s114 + $0xd0] sm:$0xff]
        %v940 = vld [vmem:[%s114 + $0xd8] sm:$0xff]
        %v941 = vld [vmem:[%s114 + $0xe0] sm:$0xff]
        %v942 = vld [vmem:[%s114 + $0xe8] sm:$0xff]
        %v943 = vld [vmem:[%s114 + $0xf0] sm:$0xff]
        %v944 = vld [vmem:[%s114 + $0xf8] sm:$0xff]
        %v945 = vld [vmem:[%s114 + $0x100] sm:$0xff]
        %v946 = vld [vmem:[%s114 + $0x108] sm:$0xff]
        %v947 = vld [vmem:[%s114 + $0x110] sm:$0xff]
        %v948 = vld [vmem:[%s114 + $0x118] sm:$0xff]
        %v949 = vld [vmem:[%s114 + $0x120] sm:$0xff]
        %v950 = vld [vmem:[%s114 + $0x128] sm:$0xff]
        %v951 = vld [vmem:[%s114 + $0x130] sm:$0xff]
        %v952 = vld [vmem:[%s114 + $0x138] sm:$0xff]
        %v953 = vld [vmem:[%s114 + $0x140] sm:$0xff]
        %v954 = vld [vmem:[%s114 + $0x148] sm:$0xff]
        %v955 = vld [vmem:[%s114 + $0x150] sm:$0xff]
        %v956 = vld [vmem:[%s114 + $0x158] sm:$0xff]
        %v957 = vld [vmem:[%s114 + $0x160] sm:$0xff]
        %v958 = vld [vmem:[%s114 + $0x168] sm:$0xff]
        %v959 = vld [vmem:[%s114 + $0x170] sm:$0xff]
        %v960 = vld [vmem:[%s114 + $0x178] sm:$0xff]
        %v961 = vld [vmem:[%s114 + $0x180] sm:$0xff]
        %v962 = vld [vmem:[%s114 + $0x188] sm:$0xff]
        %v963 = vld [vmem:[%s114 + $0x190] sm:$0xff]
        %v964 = vld [vmem:[%s114 + $0x198] sm:$0xff]
        %v965 = vld [vmem:[%s114 + $0x1a0] sm:$0xff]
        %v966 = vld [vmem:[%s114 + $0x1a8] sm:$0xff]
        %v967 = vld [vmem:[%s114 + $0x1b0] sm:$0xff]
        %v968 = vld [vmem:[%s114 + $0x1b8] sm:$0xff]
        %v969 = vld [vmem:[%s114 + $0x1c0] sm:$0xff]
        %v970 = vld [vmem:[%s114 + $0x1c8] sm:$0xff]
        %v971 = vld [vmem:[%s114 + $0x1d0] sm:$0xff]
        %v972 = vld [vmem:[%s114 + $0x1d8] sm:$0xff]
        %v973 = vld [vmem:[%s114 + $0x1e0] sm:$0xff]
        %v974 = vld [vmem:[%s114 + $0x1e8] sm:$0xff]
        %v975 = vld [vmem:[%s114 + $0x1f0] sm:$0xff]
        %v976 = vld [vmem:[%s114 + $0x1f8] sm:$0xff]
        %1041 = vrot.lane.b32.xlu0 %v913, 17
        %v1042 = vpop.permute.xlu0 %1041
        %1043 = vrot.lane.b32.xlu0 %v914, 17
        %v1044 = vpop.permute.xlu0 %1043
        %1045 = vrot.lane.b32.xlu0 %v915, 17
        %v1046 = vpop.permute.xlu0 %1045
        %1047 = vrot.lane.b32.xlu0 %v916, 17
        %v1048 = vpop.permute.xlu0 %1047
        %1049 = vrot.lane.b32.xlu0 %v917, 17
        %v1050 = vpop.permute.xlu0 %1049
        %1051 = vrot.lane.b32.xlu0 %v918, 17
        %v1052 = vpop.permute.xlu0 %1051
        %1053 = vrot.lane.b32.xlu0 %v919, 17
        %v1054 = vpop.permute.xlu0 %1053
        %1055 = vrot.lane.b32.xlu0 %v920, 17
        %v1056 = vpop.permute.xlu0 %1055
        %1057 = vrot.lane.b32.xlu0 %v921, 17
        %v1058 = vpop.permute.xlu0 %1057
        %1059 = vrot.lane.b32.xlu0 %v922, 17
        %v1060 = vpop.permute.xlu0 %1059
        %1061 = vrot.lane.b32.xlu0 %v923, 17
        %v1062 = vpop.permute.xlu0 %1061
        %1063 = vrot.lane.b32.xlu0 %v924, 17
        %v1064 = vpop.permute.xlu0 %1063
        %1065 = vrot.lane.b32.xlu0 %v925, 17
        %v1066 = vpop.permute.xlu0 %1065
        %1067 = vrot.lane.b32.xlu0 %v926, 17
        %v1068 = vpop.permute.xlu0 %1067
        %1069 = vrot.lane.b32.xlu0 %v927, 17
        %v1070 = vpop.permute.xlu0 %1069
        %1071 = vrot.lane.b32.xlu0 %v928, 17
        %v1072 = vpop.permute.xlu0 %1071
        %1073 = vrot.lane.b32.xlu0 %v929, 17
        %v1074 = vpop.permute.xlu0 %1073
        %1075 = vrot.lane.b32.xlu0 %v930, 17
        %v1076 = vpop.permute.xlu0 %1075
        %1077 = vrot.lane.b32.xlu0 %v931, 17
        %v1078 = vpop.permute.xlu0 %1077
        %1079 = vrot.lane.b32.xlu0 %v932, 17
        %v1080 = vpop.permute.xlu0 %1079
        %1081 = vrot.lane.b32.xlu0 %v933, 17
        %v1082 = vpop.permute.xlu0 %1081
        %1083 = vrot.lane.b32.xlu0 %v934, 17
        %v1084 = vpop.permute.xlu0 %1083
        %1085 = vrot.lane.b32.xlu0 %v935, 17
        %v1086 = vpop.permute.xlu0 %1085
        %1087 = vrot.lane.b32.xlu0 %v936, 17
        %v1088 = vpop.permute.xlu0 %1087
        %1089 = vrot.lane.b32.xlu0 %v937, 17
        %v1090 = vpop.permute.xlu0 %1089
        %1091 = vrot.lane.b32.xlu0 %v938, 17
        %v1092 = vpop.permute.xlu0 %1091
        %1093 = vrot.lane.b32.xlu0 %v939, 17
        %v1094 = vpop.permute.xlu0 %1093
        %1095 = vrot.lane.b32.xlu0 %v940, 17
        %v1096 = vpop.permute.xlu0 %1095
        %1097 = vrot.lane.b32.xlu0 %v941, 17
        %v1098 = vpop.permute.xlu0 %1097
        %1099 = vrot.lane.b32.xlu0 %v942, 17
        %v1100 = vpop.permute.xlu0 %1099
        %1101 = vrot.lane.b32.xlu0 %v943, 17
        %v1102 = vpop.permute.xlu0 %1101
        %1103 = vrot.lane.b32.xlu0 %v944, 17
        %v1104 = vpop.permute.xlu0 %1103
        %1105 = vrot.lane.b32.xlu0 %v945, 17
        %v1106 = vpop.permute.xlu0 %1105
        %1107 = vrot.lane.b32.xlu0 %v946, 17
        %v1108 = vpop.permute.xlu0 %1107
        %1109 = vrot.lane.b32.xlu0 %v947, 17
        %v1110 = vpop.permute.xlu0 %1109
        %1111 = vrot.lane.b32.xlu0 %v948, 17
        %v1112 = vpop.permute.xlu0 %1111
        %1113 = vrot.lane.b32.xlu0 %v949, 17
        %v1114 = vpop.permute.xlu0 %1113
        %1115 = vrot.lane.b32.xlu0 %v950, 17
        %v1116 = vpop.permute.xlu0 %1115
        %1117 = vrot.lane.b32.xlu0 %v951, 17
        %v1118 = vpop.permute.xlu0 %1117
        %1119 = vrot.lane.b32.xlu0 %v952, 17
        %v1120 = vpop.permute.xlu0 %1119
        %1121 = vrot.lane.b32.xlu0 %v953, 17
        %v1122 = vpop.permute.xlu0 %1121
        %1123 = vrot.lane.b32.xlu0 %v954, 17
        %v1124 = vpop.permute.xlu0 %1123
        %1125 = vrot.lane.b32.xlu0 %v955, 17
        %v1126 = vpop.permute.xlu0 %1125
        %1127 = vrot.lane.b32.xlu0 %v956, 17
        %v1128 = vpop.permute.xlu0 %1127
        %1129 = vrot.lane.b32.xlu0 %v957, 17
        %v1130 = vpop.permute.xlu0 %1129
        %1131 = vrot.lane.b32.xlu0 %v958, 17
        %v1132 = vpop.permute.xlu0 %1131
        %1133 = vrot.lane.b32.xlu0 %v959, 17
        %v1134 = vpop.permute.xlu0 %1133
        %1135 = vrot.lane.b32.xlu0 %v960, 17
        %v1136 = vpop.permute.xlu0 %1135
        %1137 = vrot.lane.b32.xlu0 %v961, 17
        %v1138 = vpop.permute.xlu0 %1137
        %1139 = vrot.lane.b32.xlu0 %v962, 17
        %v1140 = vpop.permute.xlu0 %1139
        %1141 = vrot.lane.b32.xlu0 %v963, 17
        %v1142 = vpop.permute.xlu0 %1141
        %1143 = vrot.lane.b32.xlu0 %v964, 17
        %v1144 = vpop.permute.xlu0 %1143
        %1145 = vrot.lane.b32.xlu0 %v965, 17
        %v1146 = vpop.permute.xlu0 %1145
        %1147 = vrot.lane.b32.xlu0 %v966, 17
        %v1148 = vpop.permute.xlu0 %1147
        %1149 = vrot.lane.b32.xlu0 %v967, 17
        %v1150 = vpop.permute.xlu0 %1149
        %1151 = vrot.lane.b32.xlu0 %v968, 17
        %v1152 = vpop.permute.xlu0 %1151
        %1153 = vrot.lane.b32.xlu0 %v969, 17
        %v1154 = vpop.permute.xlu0 %1153
        %1155 = vrot.lane.b32.xlu0 %v970, 17
        %v1156 = vpop.permute.xlu0 %1155
        %1157 = vrot.lane.b32.xlu0 %v971, 17
        %v1158 = vpop.permute.xlu0 %1157
        %1159 = vrot.lane.b32.xlu0 %v972, 17
        %v1160 = vpop.permute.xlu0 %1159
        %1161 = vrot.lane.b32.xlu0 %v973, 17
        %v1162 = vpop.permute.xlu0 %1161
        %1163 = vrot.lane.b32.xlu0 %v974, 17
        %v1164 = vpop.permute.xlu0 %1163
        %1165 = vrot.lane.b32.xlu0 %v975, 17
        %v1166 = vpop.permute.xlu0 %1165
        %1167 = vrot.lane.b32.xlu0 %v976, 17
        %v1168 = vpop.permute.xlu0 %1167
        %vm1233 = vcmask 146568
        %1234 = vst.msk [vmem:[%s462 + $0x1] sm:$0xff] %vm1233, %v1042
        %1235 = vst.msk [vmem:[%s462 + $0x9] sm:$0xff] %vm1233, %v1044
        %1236 = vst.msk [vmem:[%s462 + $0x19] sm:$0xff] %vm1233, %v1046
        %1237 = vst.msk [vmem:[%s462 + $0x21] sm:$0xff] %vm1233, %v1048
        %1238 = vst.msk [vmem:[%s462 + $0x31] sm:$0xff] %vm1233, %v1050
        %1239 = vst.msk [vmem:[%s462 + $0x39] sm:$0xff] %vm1233, %v1052
        %1240 = vst.msk [vmem:[%s462 + $0x49] sm:$0xff] %vm1233, %v1054
        %1241 = vst.msk [vmem:[%s462 + $0x51] sm:$0xff] %vm1233, %v1056
        %1242 = vst.msk [vmem:[%s462 + $0x61] sm:$0xff] %vm1233, %v1058
        %1243 = vst.msk [vmem:[%s462 + $0x69] sm:$0xff] %vm1233, %v1060
        %1244 = vst.msk [vmem:[%s462 + $0x79] sm:$0xff] %vm1233, %v1062
        %1245 = vst.msk [vmem:[%s462 + $0x81] sm:$0xff] %vm1233, %v1064
        %1246 = vst.msk [vmem:[%s462 + $0x91] sm:$0xff] %vm1233, %v1066
        %1247 = vst.msk [vmem:[%s462 + $0x99] sm:$0xff] %vm1233, %v1068
        %1248 = vst.msk [vmem:[%s462 + $0xa9] sm:$0xff] %vm1233, %v1070
        %1249 = vst.msk [vmem:[%s462 + $0xb1] sm:$0xff] %vm1233, %v1072
        %1250 = vst.msk [vmem:[%s462 + $0xf1] sm:$0xff] %vm1233, %v1074
        %1251 = vst.msk [vmem:[%s462 + $0xf9] sm:$0xff] %vm1233, %v1076
        %1252 = vst.msk [vmem:[%s462 + $0x109] sm:$0xff] %vm1233, %v1078
        %1253 = vst.msk [vmem:[%s462 + $0x111] sm:$0xff] %vm1233, %v1080
        %1254 = vst.msk [vmem:[%s462 + $0x121] sm:$0xff] %vm1233, %v1082
        %1255 = vst.msk [vmem:[%s462 + $0x129] sm:$0xff] %vm1233, %v1084
        %1256 = vst.msk [vmem:[%s462 + $0x139] sm:$0xff] %vm1233, %v1086
        %1257 = vst.msk [vmem:[%s462 + $0x141] sm:$0xff] %vm1233, %v1088
        %1258 = vst.msk [vmem:[%s462 + $0x151] sm:$0xff] %vm1233, %v1090
        %1259 = vst.msk [vmem:[%s462 + $0x159] sm:$0xff] %vm1233, %v1092
        %1260 = vst.msk [vmem:[%s462 + $0x169] sm:$0xff] %vm1233, %v1094
        %1261 = vst.msk [vmem:[%s462 + $0x171] sm:$0xff] %vm1233, %v1096
        %1262 = vst.msk [vmem:[%s462 + $0x181] sm:$0xff] %vm1233, %v1098
        %1263 = vst.msk [vmem:[%s462 + $0x189] sm:$0xff] %vm1233, %v1100
        %1264 = vst.msk [vmem:[%s462 + $0x199] sm:$0xff] %vm1233, %v1102
        %1265 = vst.msk [vmem:[%s462 + $0x1a1] sm:$0xff] %vm1233, %v1104
        %1266 = vst.msk [vmem:[%s462 + $0x1e1] sm:$0xff] %vm1233, %v1106
        %1267 = vst.msk [vmem:[%s462 + $0x1e9] sm:$0xff] %vm1233, %v1108
        %1268 = vst.msk [vmem:[%s462 + $0x1f9] sm:$0xff] %vm1233, %v1110
        %1269 = vst.msk [vmem:[%s462 + $0x201] sm:$0xff] %vm1233, %v1112
        %1270 = vst.msk [vmem:[%s462 + $0x211] sm:$0xff] %vm1233, %v1114
        %1271 = vst.msk [vmem:[%s462 + $0x219] sm:$0xff] %vm1233, %v1116
        %1272 = vst.msk [vmem:[%s462 + $0x229] sm:$0xff] %vm1233, %v1118
        %1273 = vst.msk [vmem:[%s462 + $0x231] sm:$0xff] %vm1233, %v1120
        %1274 = vst.msk [vmem:[%s462 + $0x241] sm:$0xff] %vm1233, %v1122
        %1275 = vst.msk [vmem:[%s462 + $0x249] sm:$0xff] %vm1233, %v1124
        %1276 = vst.msk [vmem:[%s462 + $0x259] sm:$0xff] %vm1233, %v1126
        %1277 = vst.msk [vmem:[%s462 + $0x261] sm:$0xff] %vm1233, %v1128
        %1278 = vst.msk [vmem:[%s462 + $0x271] sm:$0xff] %vm1233, %v1130
        %1279 = vst.msk [vmem:[%s462 + $0x279] sm:$0xff] %vm1233, %v1132
        %1280 = vst.msk [vmem:[%s462 + $0x289] sm:$0xff] %vm1233, %v1134
        %1281 = vst.msk [vmem:[%s462 + $0x291] sm:$0xff] %vm1233, %v1136
        %1282 = vst.msk [vmem:[%s462 + $0x2d1] sm:$0xff] %vm1233, %v1138
        %1283 = vst.msk [vmem:[%s462 + $0x2d9] sm:$0xff] %vm1233, %v1140
        %1284 = vst.msk [vmem:[%s462 + $0x2e9] sm:$0xff] %vm1233, %v1142
        %1285 = vst.msk [vmem:[%s462 + $0x2f1] sm:$0xff] %vm1233, %v1144
        %1286 = vst.msk [vmem:[%s462 + $0x301] sm:$0xff] %vm1233, %v1146
        %1287 = vst.msk [vmem:[%s462 + $0x309] sm:$0xff] %vm1233, %v1148
        %1288 = vst.msk [vmem:[%s462 + $0x319] sm:$0xff] %vm1233, %v1150
        %1289 = vst.msk [vmem:[%s462 + $0x321] sm:$0xff] %vm1233, %v1152
        %1290 = vst.msk [vmem:[%s462 + $0x331] sm:$0xff] %vm1233, %v1154
        %1291 = vst.msk [vmem:[%s462 + $0x339] sm:$0xff] %vm1233, %v1156
        %1292 = vst.msk [vmem:[%s462 + $0x349] sm:$0xff] %vm1233, %v1158
        %1293 = vst.msk [vmem:[%s462 + $0x351] sm:$0xff] %vm1233, %v1160
        %1294 = vst.msk [vmem:[%s462 + $0x361] sm:$0xff] %vm1233, %v1162
        %1295 = vst.msk [vmem:[%s462 + $0x369] sm:$0xff] %vm1233, %v1164
        %1296 = vst.msk [vmem:[%s462 + $0x379] sm:$0xff] %vm1233, %v1166
        %1297 = vst.msk [vmem:[%s462 + $0x381] sm:$0xff] %vm1233, %v1168
        %v1298 = vld [vmem:[%s462 + $0x10] sm:$0x1]
        %v1299 = vld [vmem:[%s462 + $0x28] sm:$0x1]
        %v1300 = vld [vmem:[%s462 + $0x40] sm:$0x1]
        %v1301 = vld [vmem:[%s462 + $0x58] sm:$0x1]
        %v1302 = vld [vmem:[%s462 + $0x70] sm:$0x1]
        %v1303 = vld [vmem:[%s462 + $0x88] sm:$0x1]
        %v1304 = vld [vmem:[%s462 + $0xa0] sm:$0x1]
        %v1305 = vld [vmem:[%s462 + $0xb8] sm:$0x1]
        %v1306 = vld [vmem:[%s462 + $0x100] sm:$0x1]
        %v1307 = vld [vmem:[%s462 + $0x118] sm:$0x1]
        %v1308 = vld [vmem:[%s462 + $0x130] sm:$0x1]
        %v1309 = vld [vmem:[%s462 + $0x148] sm:$0x1]
        %v1310 = vld [vmem:[%s462 + $0x160] sm:$0x1]
        %v1311 = vld [vmem:[%s462 + $0x178] sm:$0x1]
        %v1312 = vld [vmem:[%s462 + $0x190] sm:$0x1]
        %v1313 = vld [vmem:[%s462 + $0x1a8] sm:$0x1]
        %v1314 = vld [vmem:[%s462 + $0x1f0] sm:$0x1]
        %v1315 = vld [vmem:[%s462 + $0x208] sm:$0x1]
        %v1316 = vld [vmem:[%s462 + $0x220] sm:$0x1]
        %v1317 = vld [vmem:[%s462 + $0x238] sm:$0x1]
        %v1318 = vld [vmem:[%s462 + $0x250] sm:$0x1]
        %v1319 = vld [vmem:[%s462 + $0x268] sm:$0x1]
        %v1320 = vld [vmem:[%s462 + $0x280] sm:$0x1]
        %v1321 = vld [vmem:[%s462 + $0x298] sm:$0x1]
        %v1322 = vld [vmem:[%s462 + $0x2e0] sm:$0x1]
        %v1323 = vld [vmem:[%s462 + $0x2f8] sm:$0x1]
        %v1324 = vld [vmem:[%s462 + $0x310] sm:$0x1]
        %v1325 = vld [vmem:[%s462 + $0x328] sm:$0x1]
        %v1326 = vld [vmem:[%s462 + $0x340] sm:$0x1]
        %v1327 = vld [vmem:[%s462 + $0x358] sm:$0x1]
        %v1328 = vld [vmem:[%s462 + $0x370] sm:$0x1]
        %v1329 = vld [vmem:[%s462 + $0x388] sm:$0x1]
        %vm1330 = vcmask 139264
        %1331 = vst.msk [vmem:[%s462] sm:$0x1] %vm1330, %v1298
        %1332 = vst.msk [vmem:[%s462 + $0x18] sm:$0x1] %vm1330, %v1299
        %1333 = vst.msk [vmem:[%s462 + $0x30] sm:$0x1] %vm1330, %v1300
        %1334 = vst.msk [vmem:[%s462 + $0x48] sm:$0x1] %vm1330, %v1301
        %1335 = vst.msk [vmem:[%s462 + $0x60] sm:$0x1] %vm1330, %v1302
        %1336 = vst.msk [vmem:[%s462 + $0x78] sm:$0x1] %vm1330, %v1303
        %1337 = vst.msk [vmem:[%s462 + $0x90] sm:$0x1] %vm1330, %v1304
        %1338 = vst.msk [vmem:[%s462 + $0xa8] sm:$0x1] %vm1330, %v1305
        %1339 = vst.msk [vmem:[%s462 + $0xf0] sm:$0x1] %vm1330, %v1306
        %1340 = vst.msk [vmem:[%s462 + $0x108] sm:$0x1] %vm1330, %v1307
        %1341 = vst.msk [vmem:[%s462 + $0x120] sm:$0x1] %vm1330, %v1308
        %1342 = vst.msk [vmem:[%s462 + $0x138] sm:$0x1] %vm1330, %v1309
        %1343 = vst.msk [vmem:[%s462 + $0x150] sm:$0x1] %vm1330, %v1310
        %1344 = vst.msk [vmem:[%s462 + $0x168] sm:$0x1] %vm1330, %v1311
        %1345 = vst.msk [vmem:[%s462 + $0x180] sm:$0x1] %vm1330, %v1312
        %1346 = vst.msk [vmem:[%s462 + $0x198] sm:$0x1] %vm1330, %v1313
        %1347 = vst.msk [vmem:[%s462 + $0x1e0] sm:$0x1] %vm1330, %v1314
        %1348 = vst.msk [vmem:[%s462 + $0x1f8] sm:$0x1] %vm1330, %v1315
        %1349 = vst.msk [vmem:[%s462 + $0x210] sm:$0x1] %vm1330, %v1316
        %1350 = vst.msk [vmem:[%s462 + $0x228] sm:$0x1] %vm1330, %v1317
        %1351 = vst.msk [vmem:[%s462 + $0x240] sm:$0x1] %vm1330, %v1318
        %1352 = vst.msk [vmem:[%s462 + $0x258] sm:$0x1] %vm1330, %v1319
        %1353 = vst.msk [vmem:[%s462 + $0x270] sm:$0x1] %vm1330, %v1320
        %1354 = vst.msk [vmem:[%s462 + $0x288] sm:$0x1] %vm1330, %v1321
        %1355 = vst.msk [vmem:[%s462 + $0x2d0] sm:$0x1] %vm1330, %v1322
        %1356 = vst.msk [vmem:[%s462 + $0x2e8] sm:$0x1] %vm1330, %v1323
        %1357 = vst.msk [vmem:[%s462 + $0x300] sm:$0x1] %vm1330, %v1324
        %1358 = vst.msk [vmem:[%s462 + $0x318] sm:$0x1] %vm1330, %v1325
        %1359 = vst.msk [vmem:[%s462 + $0x330] sm:$0x1] %vm1330, %v1326
        %1360 = vst.msk [vmem:[%s462 + $0x348] sm:$0x1] %vm1330, %v1327
        %1361 = vst.msk [vmem:[%s462 + $0x360] sm:$0x1] %vm1330, %v1328
        %1362 = vst.msk [vmem:[%s462 + $0x378] sm:$0x1] %vm1330, %v1329
        %v1363 = vld [vmem:[%s462 + $0x1] sm:$0x1]
        %v1364 = vld [vmem:[%s462 + $0x19] sm:$0x1]
        %v1365 = vld [vmem:[%s462 + $0x31] sm:$0x1]
        %v1366 = vld [vmem:[%s462 + $0x49] sm:$0x1]
        %v1367 = vld [vmem:[%s462 + $0x61] sm:$0x1]
        %v1368 = vld [vmem:[%s462 + $0x79] sm:$0x1]
        %v1369 = vld [vmem:[%s462 + $0x91] sm:$0x1]
        %v1370 = vld [vmem:[%s462 + $0xa9] sm:$0x1]
        %v1371 = vld [vmem:[%s462 + $0xf1] sm:$0x1]
        %v1372 = vld [vmem:[%s462 + $0x109] sm:$0x1]
        %v1373 = vld [vmem:[%s462 + $0x121] sm:$0x1]
        %v1374 = vld [vmem:[%s462 + $0x139] sm:$0x1]
        %v1375 = vld [vmem:[%s462 + $0x151] sm:$0x1]
        %v1376 = vld [vmem:[%s462 + $0x169] sm:$0x1]
        %v1377 = vld [vmem:[%s462 + $0x181] sm:$0x1]
        %v1378 = vld [vmem:[%s462 + $0x199] sm:$0x1]
        %v1379 = vld [vmem:[%s462 + $0x1e1] sm:$0x1]
        %v1380 = vld [vmem:[%s462 + $0x1f9] sm:$0x1]
        %v1381 = vld [vmem:[%s462 + $0x211] sm:$0x1]
        %v1382 = vld [vmem:[%s462 + $0x229] sm:$0x1]
        %v1383 = vld [vmem:[%s462 + $0x241] sm:$0x1]
        %v1384 = vld [vmem:[%s462 + $0x259] sm:$0x1]
        %v1385 = vld [vmem:[%s462 + $0x271] sm:$0x1]
        %v1386 = vld [vmem:[%s462 + $0x289] sm:$0x1]
        %v1387 = vld [vmem:[%s462 + $0x2d1] sm:$0x1]
        %v1388 = vld [vmem:[%s462 + $0x2e9] sm:$0x1]
        %v1389 = vld [vmem:[%s462 + $0x301] sm:$0x1]
        %v1390 = vld [vmem:[%s462 + $0x319] sm:$0x1]
        %v1391 = vld [vmem:[%s462 + $0x331] sm:$0x1]
        %v1392 = vld [vmem:[%s462 + $0x349] sm:$0x1]
        %v1393 = vld [vmem:[%s462 + $0x361] sm:$0x1]
        %v1394 = vld [vmem:[%s462 + $0x379] sm:$0x1]
        %1395 = vst.msk [vmem:[%s462 + $0x11] sm:$0x1] %vm1330, %v1363
        %1396 = vst.msk [vmem:[%s462 + $0x29] sm:$0x1] %vm1330, %v1364
        %1397 = vst.msk [vmem:[%s462 + $0x41] sm:$0x1] %vm1330, %v1365
        %1398 = vst.msk [vmem:[%s462 + $0x59] sm:$0x1] %vm1330, %v1366
        %1399 = vst.msk [vmem:[%s462 + $0x71] sm:$0x1] %vm1330, %v1367
        %1400 = vst.msk [vmem:[%s462 + $0x89] sm:$0x1] %vm1330, %v1368
        %1401 = vst.msk [vmem:[%s462 + $0xa1] sm:$0x1] %vm1330, %v1369
        %1402 = vst.msk [vmem:[%s462 + $0xb9] sm:$0x1] %vm1330, %v1370
        %1403 = vst.msk [vmem:[%s462 + $0x101] sm:$0x1] %vm1330, %v1371
        %1404 = vst.msk [vmem:[%s462 + $0x119] sm:$0x1] %vm1330, %v1372
        %1405 = vst.msk [vmem:[%s462 + $0x131] sm:$0x1] %vm1330, %v1373
        %1406 = vst.msk [vmem:[%s462 + $0x149] sm:$0x1] %vm1330, %v1374
        %1407 = vst.msk [vmem:[%s462 + $0x161] sm:$0x1] %vm1330, %v1375
        %1408 = vst.msk [vmem:[%s462 + $0x179] sm:$0x1] %vm1330, %v1376
        %1409 = vst.msk [vmem:[%s462 + $0x191] sm:$0x1] %vm1330, %v1377
        %1410 = vst.msk [vmem:[%s462 + $0x1a9] sm:$0x1] %vm1330, %v1378
        %1411 = vst.msk [vmem:[%s462 + $0x1f1] sm:$0x1] %vm1330, %v1379
        %1412 = vst.msk [vmem:[%s462 + $0x209] sm:$0x1] %vm1330, %v1380
        %1413 = vst.msk [vmem:[%s462 + $0x221] sm:$0x1] %vm1330, %v1381
        %1414 = vst.msk [vmem:[%s462 + $0x239] sm:$0x1] %vm1330, %v1382
        %1415 = vst.msk [vmem:[%s462 + $0x251] sm:$0x1] %vm1330, %v1383
        %1416 = vst.msk [vmem:[%s462 + $0x269] sm:$0x1] %vm1330, %v1384
        %1417 = vst.msk [vmem:[%s462 + $0x281] sm:$0x1] %vm1330, %v1385
        %1418 = vst.msk [vmem:[%s462 + $0x299] sm:$0x1] %vm1330, %v1386
        %1419 = vst.msk [vmem:[%s462 + $0x2e1] sm:$0x1] %vm1330, %v1387
        %1420 = vst.msk [vmem:[%s462 + $0x2f9] sm:$0x1] %vm1330, %v1388
        %1421 = vst.msk [vmem:[%s462 + $0x311] sm:$0x1] %vm1330, %v1389
        %1422 = vst.msk [vmem:[%s462 + $0x329] sm:$0x1] %vm1330, %v1390
        %1423 = vst.msk [vmem:[%s462 + $0x341] sm:$0x1] %vm1330, %v1391
        %1424 = vst.msk [vmem:[%s462 + $0x359] sm:$0x1] %vm1330, %v1392
        %1425 = vst.msk [vmem:[%s462 + $0x371] sm:$0x1] %vm1330, %v1393
        %1426 = vst.msk [vmem:[%s462 + $0x389] sm:$0x1] %vm1330, %v1394
        %s1427 = scalar_lea.vmem %s140, 192
        %v1428 = vld [vmem:[%s1427] sm:$0xff]
        %v1429 = vld [vmem:[%s1427 + $0x8] sm:$0xff]
        %v1430 = vld [vmem:[%s1427 + $0x10] sm:$0x3]
        %v1431 = vld [vmem:[%s1427 + $0xf0] sm:$0xff]
        %v1432 = vld [vmem:[%s1427 + $0xf8] sm:$0xff]
        %v1433 = vld [vmem:[%s1427 + $0x100] sm:$0x3]
        %v1434 = vld [vmem:[%s1427 + $0x1e0] sm:$0xff]
        %v1435 = vld [vmem:[%s1427 + $0x1e8] sm:$0xff]
        %v1436 = vld [vmem:[%s1427 + $0x1f0] sm:$0x3]
        %v1437 = vld [vmem:[%s1427 + $0x2d0] sm:$0xff]
        %v1438 = vld [vmem:[%s1427 + $0x2d8] sm:$0xff]
        %v1439 = vld [vmem:[%s1427 + $0x2e0] sm:$0x3]
        %vm1440 = vcmask 146432
        %1441 = vst.msk [vmem:[%s140] sm:$0xff] %vm1440, %v1428
        %1442 = vst.msk [vmem:[%s140 + $0x8] sm:$0xff] %vm1440, %v1429
        %vm1443 = vcmask 140288
        %1444 = vst.msk [vmem:[%s140 + $0x10] sm:$0x3] %vm1443, %v1430
        %1445 = vst.msk [vmem:[%s140 + $0xf0] sm:$0xff] %vm1440, %v1431
        %1446 = vst.msk [vmem:[%s140 + $0xf8] sm:$0xff] %vm1440, %v1432
        %1447 = vst.msk [vmem:[%s140 + $0x100] sm:$0x3] %vm1443, %v1433
        %1448 = vst.msk [vmem:[%s140 + $0x1e0] sm:$0xff] %vm1440, %v1434
        %1449 = vst.msk [vmem:[%s140 + $0x1e8] sm:$0xff] %vm1440, %v1435
        %1450 = vst.msk [vmem:[%s140 + $0x1f0] sm:$0x3] %vm1443, %v1436
        %1451 = vst.msk [vmem:[%s140 + $0x2d0] sm:$0xff] %vm1440, %v1437
        %1452 = vst.msk [vmem:[%s140 + $0x2d8] sm:$0xff] %vm1440, %v1438
        %1453 = vst.msk [vmem:[%s140 + $0x2e0] sm:$0x3] %vm1443, %v1439
        %v1454 = vld [vmem:[%s462] sm:$0xff]
        %v1455 = vld [vmem:[%s462 + $0x8] sm:$0xff]
        %v1456 = vld [vmem:[%s462 + $0x10] sm:$0x3]
        %v1457 = vld [vmem:[%s462 + $0xf0] sm:$0xff]
        %v1458 = vld [vmem:[%s462 + $0xf8] sm:$0xff]
        %v1459 = vld [vmem:[%s462 + $0x100] sm:$0x3]
        %v1460 = vld [vmem:[%s462 + $0x1e0] sm:$0xff]
        %v1461 = vld [vmem:[%s462 + $0x1e8] sm:$0xff]
        %v1462 = vld [vmem:[%s462 + $0x1f0] sm:$0x3]
        %v1463 = vld [vmem:[%s462 + $0x2d0] sm:$0xff]
        %v1464 = vld [vmem:[%s462 + $0x2d8] sm:$0xff]
        %v1465 = vld [vmem:[%s462 + $0x2e0] sm:$0x3]
        %s1466 = scalar_lea.vmem %s140, 216
        %1467 = vst.msk [vmem:[%s1466] sm:$0xff] %vm1440, %v1454
        %1468 = vst.msk [vmem:[%s1466 + $0x8] sm:$0xff] %vm1440, %v1455
        %1469 = vst.msk [vmem:[%s1466 + $0x10] sm:$0x3] %vm1443, %v1456
        %1470 = vst.msk [vmem:[%s1466 + $0xf0] sm:$0xff] %vm1440, %v1457
        %1471 = vst.msk [vmem:[%s1466 + $0xf8] sm:$0xff] %vm1440, %v1458
        %1472 = vst.msk [vmem:[%s1466 + $0x100] sm:$0x3] %vm1443, %v1459
        %1473 = vst.msk [vmem:[%s1466 + $0x1e0] sm:$0xff] %vm1440, %v1460
        %1474 = vst.msk [vmem:[%s1466 + $0x1e8] sm:$0xff] %vm1440, %v1461
        %1475 = vst.msk [vmem:[%s1466 + $0x1f0] sm:$0x3] %vm1443, %v1462
        %1476 = vst.msk [vmem:[%s1466 + $0x2d0] sm:$0xff] %vm1440, %v1463
        %1477 = vst.msk [vmem:[%s1466 + $0x2d8] sm:$0xff] %vm1440, %v1464
        %1478 = vst.msk [vmem:[%s1466 + $0x2e0] sm:$0x3] %vm1443, %v1465
        %s1479 = smul.u32 4, %s15
        %p1480 = scmp.lt.s32.totalorder %s1479, 7
        %s1481 = scalar_select %p1480, %s1479, 7
        %s1482 = smul.addr %s1481, 30
        %s1483 = smul.addr %s1482, 8
        %s1484 = scalar_lea.vmem %s1, %s1483
        // Predicated region
        $region29: #{tpu_custom_call.1} parent=23 // pred_check
          %p1485 = pneg %p59
        $region30: #{tpu_custom_call.1} parent=23 // pred_check_branch
          %1487 = sbr.rel (%p1485) target = $region32
        $region31: #{tpu_custom_call.1} parent=23 // pred_region
          %s1488 = smul.u32 4, %s15
        $region32: #{tpu_custom_call.1} parent=23 // pred_fallthru
          _
      $region24: #{tpu_custom_call.1} parent=5 // pred_fallthru
        _
      %p1489 = scmp.le.s32.totalorder 2, %s10
      // Predicated region
      $region33: #{tpu_custom_call.1} parent=5 // pred_check
        %p1490 = pneg %p1489
      $region34: #{tpu_custom_call.1} parent=5 // pred_check_branch
        %1492 = sbr.rel (%p1490) target = $region36
      $region35: #{tpu_custom_call.1} parent=5 // pred_region
        %s1493 = ssub.s32 %s10, 2
        // Predicated region
        $region37: #{tpu_custom_call.1} parent=35 // pred_check
          %p1494 = pneg %p65
        $region38: #{tpu_custom_call.1} parent=35 // pred_check_branch
          %1496 = sbr.rel (%p1494) target = $region40
        $region39: #{tpu_custom_call.1} parent=35 // pred_region
          %s1497 = smul.u32 4, %s16
          %p1498 = scmp.lt.s32.totalorder %s1497, 7
          %s1499 = scalar_select %p1498, %s1497, 7
          %s1500 = smul.addr %s1499, 30
          %s1501 = smul.addr %s1500, 8
          %s1502 = scalar_lea.vmem %s1, %s1501
        $region40: #{tpu_custom_call.1} parent=35 // pred_fallthru
          _
      $region36: #{tpu_custom_call.1} parent=5 // pred_fallthru
        _
    $region6: #{tpu_custom_call.1} parent=1 // loop_footer
      %s14 = sadd.s32 1, %s10
    $region7: #{tpu_custom_call.1} parent=1 // loop_footer_branch
      %9 = sbr.rel target = $region3
    $region8: #{tpu_custom_call.1} parent=1 // loop_exit
      _
    %1503 = vsyncpa [#allocation3], 1
    %s1504 = scalar_lea.sflag [#allocation3], 1
    %1505 = vsyncpa %s1504, 1

</llo_original>
